<compile_context>
chip_gen: v7x
topology: tpu7x:2x2x1
jax: 0.10.0
libtpu: 0.0.40
codegen_flags: <defaults>
</compile_context>

<pallas_src>
import jax
import jax.numpy as jnp
from jax import lax
from jax.experimental import pallas as pl
from jax.experimental.pallas import tpu as pltpu

HIDDEN = 16
EMB_DIM = 16
N_USERS = 600000 + 1
N_LAUNCH_TYPES = 2 + 1

_LANE = 128
_MAX_B_TILE = 2048
_FULL_UNROLL_T = 32


def _round_up(x, m):
    return ((x + m - 1) // m) * m


def _gru_mean_fc_kernel(seq_ref, uemb_ref, whh_ref, const_ref, fcb_ref, out_ref):
    """GRU over time, mean over time, fused Linear([user_emb, mean]) -> 1.

    Transposed (lane-dense) layout: hidden on sublanes, batch on lanes.

    seq_ref  : (T, 1, Bt) int32  launch-type ids, time-major, lane-dense per step
    uemb_ref : (16, Bt)  f32     user-id embedding (transposed)
    whh_ref  : (48, 16)  f32     packed recurrent weight [W_hr; W_hz; W_hn]
    const_ref: (64, 3)   f32     rows 0:48  -> per-class gate-input table
                                 (col = class; r rows 0:16 incl b_ir+b_hr,
                                  z rows 16:32 incl b_iz+b_hz, n rows 32:48 incl b_in)
                                 rows 48:64 -> col0 = b_hn, col1 = fc_w (user half),
                                               col2 = fc_w (seq-mean half)
    fcb_ref  : (1, 1)    f32     fc bias (SMEM)
    out_ref  : (1, Bt)   f32     prediction row (lane-dense)
    """
    T = seq_ref.shape[0]
    Bt = seq_ref.shape[2]
    H = HIDDEN

    # Hoisted tiny constants (done once, outside the recurrence).
    whh = whh_ref[...]                       # (48, 16)
    gi0 = const_ref[0:3 * H, 0:1]            # (48, 1) class-0 input-gate term
    gi1 = const_ref[0:3 * H, 1:2]            # (48, 1) class-1
    gi2 = const_ref[0:3 * H, 2:3]            # (48, 1) class-2
    bhn = const_ref[3 * H:4 * H, 0:1]        # (16, 1)
    wfu = const_ref[3 * H:4 * H, 1:2]        # (16, 1)
    wfs = const_ref[3 * H:4 * H, 2:3]        # (16, 1)

    def step(h, acc, ids_t):
        # One fused recurrent matmul per step: (48,16) @ (16,Bt) -> (48,Bt).
        gh = jnp.dot(whh, h, preferred_element_type=jnp.float32)
        # 3-way class select (only 3 launch types): pure VPU, lane-dense broadcast.
        gi = jnp.where(ids_t == 0, gi0, jnp.where(ids_t == 1, gi1, gi2))   # (48, Bt)
        r = jax.nn.sigmoid(gi[0:H] + gh[0:H])
        z = jax.nn.sigmoid(gi[H:2 * H] + gh[H:2 * H])
        n = jnp.tanh(gi[2 * H:3 * H] + r * (gh[2 * H:3 * H] + bhn))
        h_new = (1.0 - z) * n + z * h
        return h_new, acc + h_new

    h = jnp.zeros((H, Bt), jnp.float32)
    acc = jnp.zeros((H, Bt), jnp.float32)

    if T <= _FULL_UNROLL_T:
        # Full unroll for short sequences: gives the LLO scheduler cross-step visibility.
        for t in range(T):
            h, acc = step(h, acc, seq_ref[t])
    else:
        # Bounded unroll for long sequences to cap code size / compile time.
        def body(t, carry):
            h_c, acc_c = carry
            return step(h_c, acc_c, seq_ref[t])
        h, acc = lax.fori_loop(0, T, body, (h, acc), unroll=8)

    seq_mean = acc * (1.0 / T)               # (16, Bt)

    # Final Linear(32 -> 1): elementwise multiply + single sublane reduction (no MXU).
    out = (jnp.sum(uemb_ref[...] * wfu + seq_mean * wfs, axis=0, keepdims=True)
           + fcb_ref[0, 0])                  # (1, Bt)
    out_ref[...] = out


@jax.jit
def aqy_forward(params, user_id, launch_seq):
    """Full forward pass. Embedding gathers in plain JAX, rest in the Pallas kernel."""
    H = HIDDEN
    B, T = launch_seq.shape

    # --- glue: embedding lookup (huge table), transposed to (16, B) -----------------
    user_emb_t = jnp.take(params["user_emb_table"], user_id, axis=0).astype(jnp.float32).T

    # --- tiny precompute: fold input-gate matmul into a per-class table -------------
    wih = params["gru_wih_t"]             # (16, 48)  gate order r, z, n
    whh = params["gru_whh_t"]             # (16, 48)
    bih = params["gru_bih"]               # (1, 48)
    bhh = params["gru_bhh"]               # (1, 48)
    emb_tab = params["launch_emb_table"]  # (3, 16)

    gi_all = emb_tab @ wih + bih                          # (3, 48)
    # Fold b_hr / b_hz into the table; b_hn must stay inside r*(W_hn h + b_hn).
    fold = jnp.concatenate([bhh[:, 0:2 * H], jnp.zeros((1, H), jnp.float32)], axis=1)
    gi_tab = (gi_all + fold).T                            # (48, 3)

    whh_packed = whh.T                                    # (48, 16): [W_hr; W_hz; W_hn]
    bhn = bhh[:, 2 * H:].T                                # (16, 1)

    fc_w = params["fc_w_t"]                               # (32, 1)
    wfu = fc_w[0:H, :]                                    # (16, 1)  user-emb half
    wfs = fc_w[H:, :]                                     # (16, 1)  seq-mean half
    fc_b = params["fc_b"]                                 # (1, 1)

    const_pack = jnp.concatenate(
        [gi_tab, jnp.concatenate([bhn, wfu, wfs], axis=1)], axis=0)   # (64, 3)

    # Lane-dense int32 ids, time-major: (T, 1, B).
    seq_ids = jnp.transpose(launch_seq.astype(jnp.int32))[:, None, :]

    # --- batch tiling: big lane-dense tiles; grid >= 2 when B spans > 1 lane group ---
    b_pad128 = _round_up(B, _LANE)
    if b_pad128 < 2 * _LANE:
        b_tile = b_pad128                                  # one small tile
    elif b_pad128 <= 2 * _MAX_B_TILE:
        b_tile = min(_MAX_B_TILE, _round_up(b_pad128 // 2, _LANE))   # ~2 tiles (v7x)
    else:
        b_tile = _MAX_B_TILE
    b_pad = _round_up(b_pad128, b_tile)
    grid = (b_pad // b_tile,)

    if b_pad != B:
        user_emb_t = jnp.pad(user_emb_t, ((0, 0), (0, b_pad - B)))
        seq_ids = jnp.pad(seq_ids, ((0, 0), (0, 0), (0, b_pad - B)))

    in_specs = [
        pl.BlockSpec((T, 1, b_tile), lambda i: (0, 0, i)),   # launch-type ids
        pl.BlockSpec((H, b_tile), lambda i: (0, i)),         # user embedding (16, Bt)
        pl.BlockSpec((3 * H, H), lambda i: (0, 0)),          # packed W_hh (48, 16)
        pl.BlockSpec((4 * H, 3), lambda i: (0, 0)),          # packed constants (64, 3)
        pl.BlockSpec(memory_space=pltpu.MemorySpace.SMEM),   # fc bias scalar
    ]

    out = pl.pallas_call(
        _gru_mean_fc_kernel,
        out_shape=jax.ShapeDtypeStruct((1, b_pad), jnp.float32),
        grid=grid,
        in_specs=in_specs,
        out_specs=pl.BlockSpec((1, b_tile), lambda i: (0, i)),
        compiler_params=pltpu.CompilerParams(
            dimension_semantics=("parallel",)),
    )(seq_ids, user_emb_t, whh_packed, const_pack, fc_b)

    return out[0, :B].reshape(B, 1)


def init_params(key):
    ks = jax.random.split(key, 8)
    scale = 1.0 / jnp.sqrt(jnp.float32(HIDDEN))
    params = {
        "user_emb_table": jax.random.normal(ks[0], (N_USERS, EMB_DIM), jnp.float32),
        "launch_emb_table": jax.random.normal(ks[1], (N_LAUNCH_TYPES, EMB_DIM), jnp.float32),
        # PyTorch GRU: weight_ih_l0 (3H, in), weight_hh_l0 (3H, H); stored transposed.
        "gru_wih_t": (jax.random.uniform(ks[2], (EMB_DIM, 3 * HIDDEN), jnp.float32,
                                         -1.0, 1.0) * scale),
        "gru_whh_t": (jax.random.uniform(ks[3], (HIDDEN, 3 * HIDDEN), jnp.float32,
                                         -1.0, 1.0) * scale),
        "gru_bih": (jax.random.uniform(ks[4], (1, 3 * HIDDEN), jnp.float32,
                                       -1.0, 1.0) * scale),
        "gru_bhh": (jax.random.uniform(ks[5], (1, 3 * HIDDEN), jnp.float32,
                                       -1.0, 1.0) * scale),
        # fc: Linear(32, 1); stored transposed as (32, 1).
        "fc_w_t": (jax.random.uniform(ks[6], (2 * HIDDEN, 1), jnp.float32,
                                      -1.0, 1.0) / jnp.sqrt(jnp.float32(2 * HIDDEN))),
        "fc_b": (jax.random.uniform(ks[7], (1, 1), jnp.float32,
                                    -1.0, 1.0) / jnp.sqrt(jnp.float32(2 * HIDDEN))),
    }
    return params


def reference_forward(params, user_id, launch_seq):
    """Pure-JAX reference mirroring the PyTorch forward (for validation)."""
    user_emb = jnp.take(params["user_emb_table"], user_id, axis=0)     # (B, 16)
    x = jnp.take(params["launch_emb_table"], launch_seq, axis=0)       # (B, T, 16)
    B, T, _ = x.shape
    H = HIDDEN
    wih, whh = params["gru_wih_t"], params["gru_whh_t"]
    bih, bhh = params["gru_bih"], params["gru_bhh"]

    def step(h, x_t):
        gi = x_t @ wih + bih
        gh = h @ whh + bhh
        r = jax.nn.sigmoid(gi[:, 0:H] + gh[:, 0:H])
        z = jax.nn.sigmoid(gi[:, H:2 * H] + gh[:, H:2 * H])
        n = jnp.tanh(gi[:, 2 * H:3 * H] + r * gh[:, 2 * H:3 * H])
        h_new = (1.0 - z) * n + z * h
        return h_new, h_new

    _, hs = lax.scan(step, jnp.zeros((B, H), jnp.float32),
                     jnp.transpose(x, (1, 0, 2)))
    seq_mean = jnp.mean(hs, axis=0)
    fc_in = jnp.concatenate([user_emb, seq_mean], axis=1)
    return fc_in @ params["fc_w_t"] + params["fc_b"]


if __name__ == "__main__":
    key = jax.random.PRNGKey(0)
    params = init_params(key)

    B, T = 8, 8
    k1, k2 = jax.random.split(jax.random.PRNGKey(0))
    user_id = jax.random.randint(k1, (B,), 0, N_USERS, dtype=jnp.int32)
    launch_seq = jax.random.randint(k2, (B, T), 0, N_LAUNCH_TYPES, dtype=jnp.int32)

    pred = jax.block_until_ready(aqy_forward(params, user_id, launch_seq))
    ref = jax.block_until_ready(reference_forward(params, user_id, launch_seq))

    assert pred.shape == (B, 1)
    assert jnp.allclose(pred, ref, atol=1e-4, rtol=1e-4), (pred, ref)

    print("KERNEL_OK")
</pallas_src>

<mosaic_0001>
module attributes {stable_mosaic.version = 11 : i64} {
  func.func @_gru_mean_fc_kernel(%arg0: i32, %arg1: memref<8x1x128xi32, #tpu.memory_space<vmem>>, %arg2: memref<16x128xf32, #tpu.memory_space<vmem>>, %arg3: memref<48x16xf32, #tpu.memory_space<vmem>>, %arg4: memref<64x3xf32, #tpu.memory_space<vmem>>, %arg5: memref<1x1xf32, #tpu.memory_space<smem>>, %arg6: memref<1x128xf32, #tpu.memory_space<vmem>>) attributes {dimension_semantics = [#tpu.dimension_semantics<parallel>], iteration_bounds = array<i64: 1>, scalar_prefetch = 0 : i64, scratch_operands = 0 : i64, tpu.core_type = #tpu.core_type<tc>, window_params = [{transform_indices = @transform_0, window_bounds = array<i64: 8, 1, 128>}, {transform_indices = @transform_1, window_bounds = array<i64: 16, 128>}, {pipeline_mode = #tpu.pipeline_mode<synchronous>, transform_indices = @transform_2, window_bounds = array<i64: 48, 16>}, {pipeline_mode = #tpu.pipeline_mode<synchronous>, transform_indices = @transform_3, window_bounds = array<i64: 64, 3>}, {transform_indices = @transform_4, window_bounds = array<i64: 1, 1>}, {transform_indices = @transform_5, window_bounds = array<i64: 1, 128>}]} {
    %c0 = arith.constant 0 : index
    %c0_0 = arith.constant 0 : index
    %0 = vector.load %arg3[%c0, %c0_0] : memref<48x16xf32, #tpu.memory_space<vmem>>, vector<48x16xf32>
    %c0_1 = arith.constant 0 : index
    %c0_2 = arith.constant 0 : index
    %1 = vector.load %arg4[%c0_1, %c0_2] : memref<64x3xf32, #tpu.memory_space<vmem>>, vector<48x1xf32>
    %c0_3 = arith.constant 0 : index
    %c1 = arith.constant 1 : index
    %2 = vector.load %arg4[%c0_3, %c1] : memref<64x3xf32, #tpu.memory_space<vmem>>, vector<48x1xf32>
    %c0_4 = arith.constant 0 : index
    %c2 = arith.constant 2 : index
    %3 = vector.load %arg4[%c0_4, %c2] : memref<64x3xf32, #tpu.memory_space<vmem>>, vector<48x1xf32>
    %c48 = arith.constant 48 : index
    %c0_5 = arith.constant 0 : index
    %4 = vector.load %arg4[%c48, %c0_5] : memref<64x3xf32, #tpu.memory_space<vmem>>, vector<16x1xf32>
    %c48_6 = arith.constant 48 : index
    %c1_7 = arith.constant 1 : index
    %5 = vector.load %arg4[%c48_6, %c1_7] : memref<64x3xf32, #tpu.memory_space<vmem>>, vector<16x1xf32>
    %c48_8 = arith.constant 48 : index
    %c2_9 = arith.constant 2 : index
    %6 = vector.load %arg4[%c48_8, %c2_9] : memref<64x3xf32, #tpu.memory_space<vmem>>, vector<16x1xf32>
    %cst = arith.constant 0.000000e+00 : f32
    %7 = vector.broadcast %cst : f32 to vector<16x128xf32>
    %cst_10 = arith.constant 0.000000e+00 : f32
    %8 = vector.broadcast %cst_10 : f32 to vector<16x128xf32>
    %c0_11 = arith.constant 0 : index
    %c0_12 = arith.constant 0 : index
    %c0_13 = arith.constant 0 : index
    %9 = vector.load %arg1[%c0_11, %c0_12, %c0_13] : memref<8x1x128xi32, #tpu.memory_space<vmem>>, vector<1x1x128xi32>
    %10 = vector.shape_cast %9 : vector<1x1x128xi32> to vector<1x128xi32>
    %cst_14 = arith.constant dense<0.000000e+00> : vector<48x128xf32>
    %11 = tpu.matmul %0, %7, %cst_14 {dimension_numbers = #tpu.dot_dimension_numbers<[1], [0], [0], [1], [0, 0, 1, 1], [], []>} : vector<48x16xf32>, vector<16x128xf32>, vector<48x128xf32> -> vector<48x128xf32>
    %c0_i32 = arith.constant 0 : i32
    %12 = vector.broadcast %c0_i32 : i32 to vector<1x128xi32>
    %13 = arith.cmpi eq, %10, %12 : vector<1x128xi32>
    %c1_i32 = arith.constant 1 : i32
    %14 = vector.broadcast %c1_i32 : i32 to vector<1x128xi32>
    %15 = arith.cmpi eq, %10, %14 : vector<1x128xi32>
    %16 = vector.shape_cast %15 : vector<1x128xi1> to vector<1x128xi1>
    %17 = vector.broadcast %16 : vector<1x128xi1> to vector<48x128xi1>
    %18 = vector.shape_cast %2 : vector<48x1xf32> to vector<48x1xf32>
    %19 = vector.broadcast %18 : vector<48x1xf32> to vector<48x128xf32>
    %20 = vector.shape_cast %3 : vector<48x1xf32> to vector<48x1xf32>
    %21 = vector.broadcast %20 : vector<48x1xf32> to vector<48x128xf32>
    %22 = arith.select %17, %19, %21 : vector<48x128xi1>, vector<48x128xf32>
    %23 = vector.shape_cast %13 : vector<1x128xi1> to vector<1x128xi1>
    %24 = vector.broadcast %23 : vector<1x128xi1> to vector<48x128xi1>
    %25 = vector.shape_cast %1 : vector<48x1xf32> to vector<48x1xf32>
    %26 = vector.broadcast %25 : vector<48x1xf32> to vector<48x128xf32>
    %27 = arith.select %24, %26, %22 : vector<48x128xi1>, vector<48x128xf32>
    %28 = vector.extract_strided_slice %27 {offsets = [0, 0], sizes = [16, 128], strides = [1, 1]} : vector<48x128xf32> to vector<16x128xf32>
    %29 = vector.extract_strided_slice %11 {offsets = [0, 0], sizes = [16, 128], strides = [1, 1]} : vector<48x128xf32> to vector<16x128xf32>
    %30 = arith.addf %28, %29 : vector<16x128xf32>
    %31 = arith.negf %30 : vector<16x128xf32>
    %32 = math.exp %31 : vector<16x128xf32>
    %cst_15 = arith.constant 1.000000e+00 : f32
    %33 = vector.broadcast %cst_15 : f32 to vector<16x128xf32>
    %34 = arith.addf %33, %32 : vector<16x128xf32>
    %35 = arith.divf %33, %34 : vector<16x128xf32>
    %36 = vector.extract_strided_slice %27 {offsets = [16, 0], sizes = [16, 128], strides = [1, 1]} : vector<48x128xf32> to vector<16x128xf32>
    %37 = vector.extract_strided_slice %11 {offsets = [16, 0], sizes = [16, 128], strides = [1, 1]} : vector<48x128xf32> to vector<16x128xf32>
    %38 = arith.addf %36, %37 : vector<16x128xf32>
    %39 = arith.negf %38 : vector<16x128xf32>
    %40 = math.exp %39 : vector<16x128xf32>
    %cst_16 = arith.constant 1.000000e+00 : f32
    %41 = vector.broadcast %cst_16 : f32 to vector<16x128xf32>
    %42 = arith.addf %41, %40 : vector<16x128xf32>
    %43 = arith.divf %41, %42 : vector<16x128xf32>
    %44 = vector.extract_strided_slice %27 {offsets = [32, 0], sizes = [16, 128], strides = [1, 1]} : vector<48x128xf32> to vector<16x128xf32>
    %45 = vector.extract_strided_slice %11 {offsets = [32, 0], sizes = [16, 128], strides = [1, 1]} : vector<48x128xf32> to vector<16x128xf32>
    %46 = vector.broadcast %4 : vector<16x1xf32> to vector<16x128xf32>
    %47 = arith.addf %45, %46 : vector<16x128xf32>
    %48 = arith.mulf %35, %47 : vector<16x128xf32>
    %49 = arith.addf %44, %48 : vector<16x128xf32>
    %50 = math.tanh %49 : vector<16x128xf32>
    %cst_17 = arith.constant 1.000000e+00 : f32
    %51 = vector.broadcast %cst_17 : f32 to vector<16x128xf32>
    %52 = arith.subf %51, %43 : vector<16x128xf32>
    %53 = arith.mulf %52, %50 : vector<16x128xf32>
    %54 = arith.mulf %43, %7 : vector<16x128xf32>
    %55 = arith.addf %53, %54 : vector<16x128xf32>
    %56 = arith.addf %8, %55 : vector<16x128xf32>
    %c1_18 = arith.constant 1 : index
    %c0_19 = arith.constant 0 : index
    %c0_20 = arith.constant 0 : index
    %57 = vector.load %arg1[%c1_18, %c0_19, %c0_20] : memref<8x1x128xi32, #tpu.memory_space<vmem>>, vector<1x1x128xi32>
    %58 = vector.shape_cast %57 : vector<1x1x128xi32> to vector<1x128xi32>
    %cst_21 = arith.constant dense<0.000000e+00> : vector<48x128xf32>
    %59 = tpu.matmul %0, %55, %cst_21 {dimension_numbers = #tpu.dot_dimension_numbers<[1], [0], [0], [1], [0, 0, 1, 1], [], []>} : vector<48x16xf32>, vector<16x128xf32>, vector<48x128xf32> -> vector<48x128xf32>
    %c0_i32_22 = arith.constant 0 : i32
    %60 = vector.broadcast %c0_i32_22 : i32 to vector<1x128xi32>
    %61 = arith.cmpi eq, %58, %60 : vector<1x128xi32>
    %c1_i32_23 = arith.constant 1 : i32
    %62 = vector.broadcast %c1_i32_23 : i32 to vector<1x128xi32>
    %63 = arith.cmpi eq, %58, %62 : vector<1x128xi32>
    %64 = vector.shape_cast %63 : vector<1x128xi1> to vector<1x128xi1>
    %65 = vector.broadcast %64 : vector<1x128xi1> to vector<48x128xi1>
    %66 = vector.shape_cast %2 : vector<48x1xf32> to vector<48x1xf32>
    %67 = vector.broadcast %66 : vector<48x1xf32> to vector<48x128xf32>
    %68 = vector.shape_cast %3 : vector<48x1xf32> to vector<48x1xf32>
    %69 = vector.broadcast %68 : vector<48x1xf32> to vector<48x128xf32>
    %70 = arith.select %65, %67, %69 : vector<48x128xi1>, vector<48x128xf32>
    %71 = vector.shape_cast %61 : vector<1x128xi1> to vector<1x128xi1>
    %72 = vector.broadcast %71 : vector<1x128xi1> to vector<48x128xi1>
    %73 = vector.shape_cast %1 : vector<48x1xf32> to vector<48x1xf32>
    %74 = vector.broadcast %73 : vector<48x1xf32> to vector<48x128xf32>
    %75 = arith.select %72, %74, %70 : vector<48x128xi1>, vector<48x128xf32>
    %76 = vector.extract_strided_slice %75 {offsets = [0, 0], sizes = [16, 128], strides = [1, 1]} : vector<48x128xf32> to vector<16x128xf32>
    %77 = vector.extract_strided_slice %59 {offsets = [0, 0], sizes = [16, 128], strides = [1, 1]} : vector<48x128xf32> to vector<16x128xf32>
    %78 = arith.addf %76, %77 : vector<16x128xf32>
    %79 = arith.negf %78 : vector<16x128xf32>
    %80 = math.exp %79 : vector<16x128xf32>
    %cst_24 = arith.constant 1.000000e+00 : f32
    %81 = vector.broadcast %cst_24 : f32 to vector<16x128xf32>
    %82 = arith.addf %81, %80 : vector<16x128xf32>
    %83 = arith.divf %81, %82 : vector<16x128xf32>
    %84 = vector.extract_strided_slice %75 {offsets = [16, 0], sizes = [16, 128], strides = [1, 1]} : vector<48x128xf32> to vector<16x128xf32>
    %85 = vector.extract_strided_slice %59 {offsets = [16, 0], sizes = [16, 128], strides = [1, 1]} : vector<48x128xf32> to vector<16x128xf32>
    %86 = arith.addf %84, %85 : vector<16x128xf32>
    %87 = arith.negf %86 : vector<16x128xf32>
    %88 = math.exp %87 : vector<16x128xf32>
    %cst_25 = arith.constant 1.000000e+00 : f32
    %89 = vector.broadcast %cst_25 : f32 to vector<16x128xf32>
    %90 = arith.addf %89, %88 : vector<16x128xf32>
    %91 = arith.divf %89, %90 : vector<16x128xf32>
    %92 = vector.extract_strided_slice %75 {offsets = [32, 0], sizes = [16, 128], strides = [1, 1]} : vector<48x128xf32> to vector<16x128xf32>
    %93 = vector.extract_strided_slice %59 {offsets = [32, 0], sizes = [16, 128], strides = [1, 1]} : vector<48x128xf32> to vector<16x128xf32>
    %94 = vector.broadcast %4 : vector<16x1xf32> to vector<16x128xf32>
    %95 = arith.addf %93, %94 : vector<16x128xf32>
    %96 = arith.mulf %83, %95 : vector<16x128xf32>
    %97 = arith.addf %92, %96 : vector<16x128xf32>
    %98 = math.tanh %97 : vector<16x128xf32>
    %cst_26 = arith.constant 1.000000e+00 : f32
    %99 = vector.broadcast %cst_26 : f32 to vector<16x128xf32>
    %100 = arith.subf %99, %91 : vector<16x128xf32>
    %101 = arith.mulf %100, %98 : vector<16x128xf32>
    %102 = arith.mulf %91, %55 : vector<16x128xf32>
    %103 = arith.addf %101, %102 : vector<16x128xf32>
    %104 = arith.addf %56, %103 : vector<16x128xf32>
    %c2_27 = arith.constant 2 : index
    %c0_28 = arith.constant 0 : index
    %c0_29 = arith.constant 0 : index
    %105 = vector.load %arg1[%c2_27, %c0_28, %c0_29] : memref<8x1x128xi32, #tpu.memory_space<vmem>>, vector<1x1x128xi32>
    %106 = vector.shape_cast %105 : vector<1x1x128xi32> to vector<1x128xi32>
    %cst_30 = arith.constant dense<0.000000e+00> : vector<48x128xf32>
    %107 = tpu.matmul %0, %103, %cst_30 {dimension_numbers = #tpu.dot_dimension_numbers<[1], [0], [0], [1], [0, 0, 1, 1], [], []>} : vector<48x16xf32>, vector<16x128xf32>, vector<48x128xf32> -> vector<48x128xf32>
    %c0_i32_31 = arith.constant 0 : i32
    %108 = vector.broadcast %c0_i32_31 : i32 to vector<1x128xi32>
    %109 = arith.cmpi eq, %106, %108 : vector<1x128xi32>
    %c1_i32_32 = arith.constant 1 : i32
    %110 = vector.broadcast %c1_i32_32 : i32 to vector<1x128xi32>
    %111 = arith.cmpi eq, %106, %110 : vector<1x128xi32>
    %112 = vector.shape_cast %111 : vector<1x128xi1> to vector<1x128xi1>
    %113 = vector.broadcast %112 : vector<1x128xi1> to vector<48x128xi1>
    %114 = vector.shape_cast %2 : vector<48x1xf32> to vector<48x1xf32>
    %115 = vector.broadcast %114 : vector<48x1xf32> to vector<48x128xf32>
    %116 = vector.shape_cast %3 : vector<48x1xf32> to vector<48x1xf32>
    %117 = vector.broadcast %116 : vector<48x1xf32> to vector<48x128xf32>
    %118 = arith.select %113, %115, %117 : vector<48x128xi1>, vector<48x128xf32>
    %119 = vector.shape_cast %109 : vector<1x128xi1> to vector<1x128xi1>
    %120 = vector.broadcast %119 : vector<1x128xi1> to vector<48x128xi1>
    %121 = vector.shape_cast %1 : vector<48x1xf32> to vector<48x1xf32>
    %122 = vector.broadcast %121 : vector<48x1xf32> to vector<48x128xf32>
    %123 = arith.select %120, %122, %118 : vector<48x128xi1>, vector<48x128xf32>
    %124 = vector.extract_strided_slice %123 {offsets = [0, 0], sizes = [16, 128], strides = [1, 1]} : vector<48x128xf32> to vector<16x128xf32>
    %125 = vector.extract_strided_slice %107 {offsets = [0, 0], sizes = [16, 128], strides = [1, 1]} : vector<48x128xf32> to vector<16x128xf32>
    %126 = arith.addf %124, %125 : vector<16x128xf32>
    %127 = arith.negf %126 : vector<16x128xf32>
    %128 = math.exp %127 : vector<16x128xf32>
    %cst_33 = arith.constant 1.000000e+00 : f32
    %129 = vector.broadcast %cst_33 : f32 to vector<16x128xf32>
    %130 = arith.addf %129, %128 : vector<16x128xf32>
    %131 = arith.divf %129, %130 : vector<16x128xf32>
    %132 = vector.extract_strided_slice %123 {offsets = [16, 0], sizes = [16, 128], strides = [1, 1]} : vector<48x128xf32> to vector<16x128xf32>
    %133 = vector.extract_strided_slice %107 {offsets = [16, 0], sizes = [16, 128], strides = [1, 1]} : vector<48x128xf32> to vector<16x128xf32>
    %134 = arith.addf %132, %133 : vector<16x128xf32>
    %135 = arith.negf %134 : vector<16x128xf32>
    %136 = math.exp %135 : vector<16x128xf32>
    %cst_34 = arith.constant 1.000000e+00 : f32
    %137 = vector.broadcast %cst_34 : f32 to vector<16x128xf32>
    %138 = arith.addf %137, %136 : vector<16x128xf32>
    %139 = arith.divf %137, %138 : vector<16x128xf32>
    %140 = vector.extract_strided_slice %123 {offsets = [32, 0], sizes = [16, 128], strides = [1, 1]} : vector<48x128xf32> to vector<16x128xf32>
    %141 = vector.extract_strided_slice %107 {offsets = [32, 0], sizes = [16, 128], strides = [1, 1]} : vector<48x128xf32> to vector<16x128xf32>
    %142 = vector.broadcast %4 : vector<16x1xf32> to vector<16x128xf32>
    %143 = arith.addf %141, %142 : vector<16x128xf32>
    %144 = arith.mulf %131, %143 : vector<16x128xf32>
    %145 = arith.addf %140, %144 : vector<16x128xf32>
    %146 = math.tanh %145 : vector<16x128xf32>
    %cst_35 = arith.constant 1.000000e+00 : f32
    %147 = vector.broadcast %cst_35 : f32 to vector<16x128xf32>
    %148 = arith.subf %147, %139 : vector<16x128xf32>
    %149 = arith.mulf %148, %146 : vector<16x128xf32>
    %150 = arith.mulf %139, %103 : vector<16x128xf32>
    %151 = arith.addf %149, %150 : vector<16x128xf32>
    %152 = arith.addf %104, %151 : vector<16x128xf32>
    %c3 = arith.constant 3 : index
    %c0_36 = arith.constant 0 : index
    %c0_37 = arith.constant 0 : index
    %153 = vector.load %arg1[%c3, %c0_36, %c0_37] : memref<8x1x128xi32, #tpu.memory_space<vmem>>, vector<1x1x128xi32>
    %154 = vector.shape_cast %153 : vector<1x1x128xi32> to vector<1x128xi32>
    %cst_38 = arith.constant dense<0.000000e+00> : vector<48x128xf32>
    %155 = tpu.matmul %0, %151, %cst_38 {dimension_numbers = #tpu.dot_dimension_numbers<[1], [0], [0], [1], [0, 0, 1, 1], [], []>} : vector<48x16xf32>, vector<16x128xf32>, vector<48x128xf32> -> vector<48x128xf32>
    %c0_i32_39 = arith.constant 0 : i32
    %156 = vector.broadcast %c0_i32_39 : i32 to vector<1x128xi32>
    %157 = arith.cmpi eq, %154, %156 : vector<1x128xi32>
    %c1_i32_40 = arith.constant 1 : i32
    %158 = vector.broadcast %c1_i32_40 : i32 to vector<1x128xi32>
    %159 = arith.cmpi eq, %154, %158 : vector<1x128xi32>
    %160 = vector.shape_cast %159 : vector<1x128xi1> to vector<1x128xi1>
    %161 = vector.broadcast %160 : vector<1x128xi1> to vector<48x128xi1>
    %162 = vector.shape_cast %2 : vector<48x1xf32> to vector<48x1xf32>
    %163 = vector.broadcast %162 : vector<48x1xf32> to vector<48x128xf32>
    %164 = vector.shape_cast %3 : vector<48x1xf32> to vector<48x1xf32>
    %165 = vector.broadcast %164 : vector<48x1xf32> to vector<48x128xf32>
    %166 = arith.select %161, %163, %165 : vector<48x128xi1>, vector<48x128xf32>
    %167 = vector.shape_cast %157 : vector<1x128xi1> to vector<1x128xi1>
    %168 = vector.broadcast %167 : vector<1x128xi1> to vector<48x128xi1>
    %169 = vector.shape_cast %1 : vector<48x1xf32> to vector<48x1xf32>
    %170 = vector.broadcast %169 : vector<48x1xf32> to vector<48x128xf32>
    %171 = arith.select %168, %170, %166 : vector<48x128xi1>, vector<48x128xf32>
    %172 = vector.extract_strided_slice %171 {offsets = [0, 0], sizes = [16, 128], strides = [1, 1]} : vector<48x128xf32> to vector<16x128xf32>
    %173 = vector.extract_strided_slice %155 {offsets = [0, 0], sizes = [16, 128], strides = [1, 1]} : vector<48x128xf32> to vector<16x128xf32>
    %174 = arith.addf %172, %173 : vector<16x128xf32>
    %175 = arith.negf %174 : vector<16x128xf32>
    %176 = math.exp %175 : vector<16x128xf32>
    %cst_41 = arith.constant 1.000000e+00 : f32
    %177 = vector.broadcast %cst_41 : f32 to vector<16x128xf32>
    %178 = arith.addf %177, %176 : vector<16x128xf32>
    %179 = arith.divf %177, %178 : vector<16x128xf32>
    %180 = vector.extract_strided_slice %171 {offsets = [16, 0], sizes = [16, 128], strides = [1, 1]} : vector<48x128xf32> to vector<16x128xf32>
    %181 = vector.extract_strided_slice %155 {offsets = [16, 0], sizes = [16, 128], strides = [1, 1]} : vector<48x128xf32> to vector<16x128xf32>
    %182 = arith.addf %180, %181 : vector<16x128xf32>
    %183 = arith.negf %182 : vector<16x128xf32>
    %184 = math.exp %183 : vector<16x128xf32>
    %cst_42 = arith.constant 1.000000e+00 : f32
    %185 = vector.broadcast %cst_42 : f32 to vector<16x128xf32>
    %186 = arith.addf %185, %184 : vector<16x128xf32>
    %187 = arith.divf %185, %186 : vector<16x128xf32>
    %188 = vector.extract_strided_slice %171 {offsets = [32, 0], sizes = [16, 128], strides = [1, 1]} : vector<48x128xf32> to vector<16x128xf32>
    %189 = vector.extract_strided_slice %155 {offsets = [32, 0], sizes = [16, 128], strides = [1, 1]} : vector<48x128xf32> to vector<16x128xf32>
    %190 = vector.broadcast %4 : vector<16x1xf32> to vector<16x128xf32>
    %191 = arith.addf %189, %190 : vector<16x128xf32>
    %192 = arith.mulf %179, %191 : vector<16x128xf32>
    %193 = arith.addf %188, %192 : vector<16x128xf32>
    %194 = math.tanh %193 : vector<16x128xf32>
    %cst_43 = arith.constant 1.000000e+00 : f32
    %195 = vector.broadcast %cst_43 : f32 to vector<16x128xf32>
    %196 = arith.subf %195, %187 : vector<16x128xf32>
    %197 = arith.mulf %196, %194 : vector<16x128xf32>
    %198 = arith.mulf %187, %151 : vector<16x128xf32>
    %199 = arith.addf %197, %198 : vector<16x128xf32>
    %200 = arith.addf %152, %199 : vector<16x128xf32>
    %c4 = arith.constant 4 : index
    %c0_44 = arith.constant 0 : index
    %c0_45 = arith.constant 0 : index
    %201 = vector.load %arg1[%c4, %c0_44, %c0_45] : memref<8x1x128xi32, #tpu.memory_space<vmem>>, vector<1x1x128xi32>
    %202 = vector.shape_cast %201 : vector<1x1x128xi32> to vector<1x128xi32>
    %cst_46 = arith.constant dense<0.000000e+00> : vector<48x128xf32>
    %203 = tpu.matmul %0, %199, %cst_46 {dimension_numbers = #tpu.dot_dimension_numbers<[1], [0], [0], [1], [0, 0, 1, 1], [], []>} : vector<48x16xf32>, vector<16x128xf32>, vector<48x128xf32> -> vector<48x128xf32>
    %c0_i32_47 = arith.constant 0 : i32
    %204 = vector.broadcast %c0_i32_47 : i32 to vector<1x128xi32>
    %205 = arith.cmpi eq, %202, %204 : vector<1x128xi32>
    %c1_i32_48 = arith.constant 1 : i32
    %206 = vector.broadcast %c1_i32_48 : i32 to vector<1x128xi32>
    %207 = arith.cmpi eq, %202, %206 : vector<1x128xi32>
    %208 = vector.shape_cast %207 : vector<1x128xi1> to vector<1x128xi1>
    %209 = vector.broadcast %208 : vector<1x128xi1> to vector<48x128xi1>
    %210 = vector.shape_cast %2 : vector<48x1xf32> to vector<48x1xf32>
    %211 = vector.broadcast %210 : vector<48x1xf32> to vector<48x128xf32>
    %212 = vector.shape_cast %3 : vector<48x1xf32> to vector<48x1xf32>
    %213 = vector.broadcast %212 : vector<48x1xf32> to vector<48x128xf32>
    %214 = arith.select %209, %211, %213 : vector<48x128xi1>, vector<48x128xf32>
    %215 = vector.shape_cast %205 : vector<1x128xi1> to vector<1x128xi1>
    %216 = vector.broadcast %215 : vector<1x128xi1> to vector<48x128xi1>
    %217 = vector.shape_cast %1 : vector<48x1xf32> to vector<48x1xf32>
    %218 = vector.broadcast %217 : vector<48x1xf32> to vector<48x128xf32>
    %219 = arith.select %216, %218, %214 : vector<48x128xi1>, vector<48x128xf32>
    %220 = vector.extract_strided_slice %219 {offsets = [0, 0], sizes = [16, 128], strides = [1, 1]} : vector<48x128xf32> to vector<16x128xf32>
    %221 = vector.extract_strided_slice %203 {offsets = [0, 0], sizes = [16, 128], strides = [1, 1]} : vector<48x128xf32> to vector<16x128xf32>
    %222 = arith.addf %220, %221 : vector<16x128xf32>
    %223 = arith.negf %222 : vector<16x128xf32>
    %224 = math.exp %223 : vector<16x128xf32>
    %cst_49 = arith.constant 1.000000e+00 : f32
    %225 = vector.broadcast %cst_49 : f32 to vector<16x128xf32>
    %226 = arith.addf %225, %224 : vector<16x128xf32>
    %227 = arith.divf %225, %226 : vector<16x128xf32>
    %228 = vector.extract_strided_slice %219 {offsets = [16, 0], sizes = [16, 128], strides = [1, 1]} : vector<48x128xf32> to vector<16x128xf32>
    %229 = vector.extract_strided_slice %203 {offsets = [16, 0], sizes = [16, 128], strides = [1, 1]} : vector<48x128xf32> to vector<16x128xf32>
    %230 = arith.addf %228, %229 : vector<16x128xf32>
    %231 = arith.negf %230 : vector<16x128xf32>
    %232 = math.exp %231 : vector<16x128xf32>
    %cst_50 = arith.constant 1.000000e+00 : f32
    %233 = vector.broadcast %cst_50 : f32 to vector<16x128xf32>
    %234 = arith.addf %233, %232 : vector<16x128xf32>
    %235 = arith.divf %233, %234 : vector<16x128xf32>
    %236 = vector.extract_strided_slice %219 {offsets = [32, 0], sizes = [16, 128], strides = [1, 1]} : vector<48x128xf32> to vector<16x128xf32>
    %237 = vector.extract_strided_slice %203 {offsets = [32, 0], sizes = [16, 128], strides = [1, 1]} : vector<48x128xf32> to vector<16x128xf32>
    %238 = vector.broadcast %4 : vector<16x1xf32> to vector<16x128xf32>
    %239 = arith.addf %237, %238 : vector<16x128xf32>
    %240 = arith.mulf %227, %239 : vector<16x128xf32>
    %241 = arith.addf %236, %240 : vector<16x128xf32>
    %242 = math.tanh %241 : vector<16x128xf32>
    %cst_51 = arith.constant 1.000000e+00 : f32
    %243 = vector.broadcast %cst_51 : f32 to vector<16x128xf32>
    %244 = arith.subf %243, %235 : vector<16x128xf32>
    %245 = arith.mulf %244, %242 : vector<16x128xf32>
    %246 = arith.mulf %235, %199 : vector<16x128xf32>
    %247 = arith.addf %245, %246 : vector<16x128xf32>
    %248 = arith.addf %200, %247 : vector<16x128xf32>
    %c5 = arith.constant 5 : index
    %c0_52 = arith.constant 0 : index
    %c0_53 = arith.constant 0 : index
    %249 = vector.load %arg1[%c5, %c0_52, %c0_53] : memref<8x1x128xi32, #tpu.memory_space<vmem>>, vector<1x1x128xi32>
    %250 = vector.shape_cast %249 : vector<1x1x128xi32> to vector<1x128xi32>
    %cst_54 = arith.constant dense<0.000000e+00> : vector<48x128xf32>
    %251 = tpu.matmul %0, %247, %cst_54 {dimension_numbers = #tpu.dot_dimension_numbers<[1], [0], [0], [1], [0, 0, 1, 1], [], []>} : vector<48x16xf32>, vector<16x128xf32>, vector<48x128xf32> -> vector<48x128xf32>
    %c0_i32_55 = arith.constant 0 : i32
    %252 = vector.broadcast %c0_i32_55 : i32 to vector<1x128xi32>
    %253 = arith.cmpi eq, %250, %252 : vector<1x128xi32>
    %c1_i32_56 = arith.constant 1 : i32
    %254 = vector.broadcast %c1_i32_56 : i32 to vector<1x128xi32>
    %255 = arith.cmpi eq, %250, %254 : vector<1x128xi32>
    %256 = vector.shape_cast %255 : vector<1x128xi1> to vector<1x128xi1>
    %257 = vector.broadcast %256 : vector<1x128xi1> to vector<48x128xi1>
    %258 = vector.shape_cast %2 : vector<48x1xf32> to vector<48x1xf32>
    %259 = vector.broadcast %258 : vector<48x1xf32> to vector<48x128xf32>
    %260 = vector.shape_cast %3 : vector<48x1xf32> to vector<48x1xf32>
    %261 = vector.broadcast %260 : vector<48x1xf32> to vector<48x128xf32>
    %262 = arith.select %257, %259, %261 : vector<48x128xi1>, vector<48x128xf32>
    %263 = vector.shape_cast %253 : vector<1x128xi1> to vector<1x128xi1>
    %264 = vector.broadcast %263 : vector<1x128xi1> to vector<48x128xi1>
    %265 = vector.shape_cast %1 : vector<48x1xf32> to vector<48x1xf32>
    %266 = vector.broadcast %265 : vector<48x1xf32> to vector<48x128xf32>
    %267 = arith.select %264, %266, %262 : vector<48x128xi1>, vector<48x128xf32>
    %268 = vector.extract_strided_slice %267 {offsets = [0, 0], sizes = [16, 128], strides = [1, 1]} : vector<48x128xf32> to vector<16x128xf32>
    %269 = vector.extract_strided_slice %251 {offsets = [0, 0], sizes = [16, 128], strides = [1, 1]} : vector<48x128xf32> to vector<16x128xf32>
    %270 = arith.addf %268, %269 : vector<16x128xf32>
    %271 = arith.negf %270 : vector<16x128xf32>
    %272 = math.exp %271 : vector<16x128xf32>
    %cst_57 = arith.constant 1.000000e+00 : f32
    %273 = vector.broadcast %cst_57 : f32 to vector<16x128xf32>
    %274 = arith.addf %273, %272 : vector<16x128xf32>
    %275 = arith.divf %273, %274 : vector<16x128xf32>
    %276 = vector.extract_strided_slice %267 {offsets = [16, 0], sizes = [16, 128], strides = [1, 1]} : vector<48x128xf32> to vector<16x128xf32>
    %277 = vector.extract_strided_slice %251 {offsets = [16, 0], sizes = [16, 128], strides = [1, 1]} : vector<48x128xf32> to vector<16x128xf32>
    %278 = arith.addf %276, %277 : vector<16x128xf32>
    %279 = arith.negf %278 : vector<16x128xf32>
    %280 = math.exp %279 : vector<16x128xf32>
    %cst_58 = arith.constant 1.000000e+00 : f32
    %281 = vector.broadcast %cst_58 : f32 to vector<16x128xf32>
    %282 = arith.addf %281, %280 : vector<16x128xf32>
    %283 = arith.divf %281, %282 : vector<16x128xf32>
    %284 = vector.extract_strided_slice %267 {offsets = [32, 0], sizes = [16, 128], strides = [1, 1]} : vector<48x128xf32> to vector<16x128xf32>
    %285 = vector.extract_strided_slice %251 {offsets = [32, 0], sizes = [16, 128], strides = [1, 1]} : vector<48x128xf32> to vector<16x128xf32>
    %286 = vector.broadcast %4 : vector<16x1xf32> to vector<16x128xf32>
    %287 = arith.addf %285, %286 : vector<16x128xf32>
    %288 = arith.mulf %275, %287 : vector<16x128xf32>
    %289 = arith.addf %284, %288 : vector<16x128xf32>
    %290 = math.tanh %289 : vector<16x128xf32>
    %cst_59 = arith.constant 1.000000e+00 : f32
    %291 = vector.broadcast %cst_59 : f32 to vector<16x128xf32>
    %292 = arith.subf %291, %283 : vector<16x128xf32>
    %293 = arith.mulf %292, %290 : vector<16x128xf32>
    %294 = arith.mulf %283, %247 : vector<16x128xf32>
    %295 = arith.addf %293, %294 : vector<16x128xf32>
    %296 = arith.addf %248, %295 : vector<16x128xf32>
    %c6 = arith.constant 6 : index
    %c0_60 = arith.constant 0 : index
    %c0_61 = arith.constant 0 : index
    %297 = vector.load %arg1[%c6, %c0_60, %c0_61] : memref<8x1x128xi32, #tpu.memory_space<vmem>>, vector<1x1x128xi32>
    %298 = vector.shape_cast %297 : vector<1x1x128xi32> to vector<1x128xi32>
    %cst_62 = arith.constant dense<0.000000e+00> : vector<48x128xf32>
    %299 = tpu.matmul %0, %295, %cst_62 {dimension_numbers = #tpu.dot_dimension_numbers<[1], [0], [0], [1], [0, 0, 1, 1], [], []>} : vector<48x16xf32>, vector<16x128xf32>, vector<48x128xf32> -> vector<48x128xf32>
    %c0_i32_63 = arith.constant 0 : i32
    %300 = vector.broadcast %c0_i32_63 : i32 to vector<1x128xi32>
    %301 = arith.cmpi eq, %298, %300 : vector<1x128xi32>
    %c1_i32_64 = arith.constant 1 : i32
    %302 = vector.broadcast %c1_i32_64 : i32 to vector<1x128xi32>
    %303 = arith.cmpi eq, %298, %302 : vector<1x128xi32>
    %304 = vector.shape_cast %303 : vector<1x128xi1> to vector<1x128xi1>
    %305 = vector.broadcast %304 : vector<1x128xi1> to vector<48x128xi1>
    %306 = vector.shape_cast %2 : vector<48x1xf32> to vector<48x1xf32>
    %307 = vector.broadcast %306 : vector<48x1xf32> to vector<48x128xf32>
    %308 = vector.shape_cast %3 : vector<48x1xf32> to vector<48x1xf32>
    %309 = vector.broadcast %308 : vector<48x1xf32> to vector<48x128xf32>
    %310 = arith.select %305, %307, %309 : vector<48x128xi1>, vector<48x128xf32>
    %311 = vector.shape_cast %301 : vector<1x128xi1> to vector<1x128xi1>
    %312 = vector.broadcast %311 : vector<1x128xi1> to vector<48x128xi1>
    %313 = vector.shape_cast %1 : vector<48x1xf32> to vector<48x1xf32>
    %314 = vector.broadcast %313 : vector<48x1xf32> to vector<48x128xf32>
    %315 = arith.select %312, %314, %310 : vector<48x128xi1>, vector<48x128xf32>
    %316 = vector.extract_strided_slice %315 {offsets = [0, 0], sizes = [16, 128], strides = [1, 1]} : vector<48x128xf32> to vector<16x128xf32>
    %317 = vector.extract_strided_slice %299 {offsets = [0, 0], sizes = [16, 128], strides = [1, 1]} : vector<48x128xf32> to vector<16x128xf32>
    %318 = arith.addf %316, %317 : vector<16x128xf32>
    %319 = arith.negf %318 : vector<16x128xf32>
    %320 = math.exp %319 : vector<16x128xf32>
    %cst_65 = arith.constant 1.000000e+00 : f32
    %321 = vector.broadcast %cst_65 : f32 to vector<16x128xf32>
    %322 = arith.addf %321, %320 : vector<16x128xf32>
    %323 = arith.divf %321, %322 : vector<16x128xf32>
    %324 = vector.extract_strided_slice %315 {offsets = [16, 0], sizes = [16, 128], strides = [1, 1]} : vector<48x128xf32> to vector<16x128xf32>
    %325 = vector.extract_strided_slice %299 {offsets = [16, 0], sizes = [16, 128], strides = [1, 1]} : vector<48x128xf32> to vector<16x128xf32>
    %326 = arith.addf %324, %325 : vector<16x128xf32>
    %327 = arith.negf %326 : vector<16x128xf32>
    %328 = math.exp %327 : vector<16x128xf32>
    %cst_66 = arith.constant 1.000000e+00 : f32
    %329 = vector.broadcast %cst_66 : f32 to vector<16x128xf32>
    %330 = arith.addf %329, %328 : vector<16x128xf32>
    %331 = arith.divf %329, %330 : vector<16x128xf32>
    %332 = vector.extract_strided_slice %315 {offsets = [32, 0], sizes = [16, 128], strides = [1, 1]} : vector<48x128xf32> to vector<16x128xf32>
    %333 = vector.extract_strided_slice %299 {offsets = [32, 0], sizes = [16, 128], strides = [1, 1]} : vector<48x128xf32> to vector<16x128xf32>
    %334 = vector.broadcast %4 : vector<16x1xf32> to vector<16x128xf32>
    %335 = arith.addf %333, %334 : vector<16x128xf32>
    %336 = arith.mulf %323, %335 : vector<16x128xf32>
    %337 = arith.addf %332, %336 : vector<16x128xf32>
    %338 = math.tanh %337 : vector<16x128xf32>
    %cst_67 = arith.constant 1.000000e+00 : f32
    %339 = vector.broadcast %cst_67 : f32 to vector<16x128xf32>
    %340 = arith.subf %339, %331 : vector<16x128xf32>
    %341 = arith.mulf %340, %338 : vector<16x128xf32>
    %342 = arith.mulf %331, %295 : vector<16x128xf32>
    %343 = arith.addf %341, %342 : vector<16x128xf32>
    %344 = arith.addf %296, %343 : vector<16x128xf32>
    %c7 = arith.constant 7 : index
    %c0_68 = arith.constant 0 : index
    %c0_69 = arith.constant 0 : index
    %345 = vector.load %arg1[%c7, %c0_68, %c0_69] : memref<8x1x128xi32, #tpu.memory_space<vmem>>, vector<1x1x128xi32>
    %346 = vector.shape_cast %345 : vector<1x1x128xi32> to vector<1x128xi32>
    %cst_70 = arith.constant dense<0.000000e+00> : vector<48x128xf32>
    %347 = tpu.matmul %0, %343, %cst_70 {dimension_numbers = #tpu.dot_dimension_numbers<[1], [0], [0], [1], [0, 0, 1, 1], [], []>} : vector<48x16xf32>, vector<16x128xf32>, vector<48x128xf32> -> vector<48x128xf32>
    %c0_i32_71 = arith.constant 0 : i32
    %348 = vector.broadcast %c0_i32_71 : i32 to vector<1x128xi32>
    %349 = arith.cmpi eq, %346, %348 : vector<1x128xi32>
    %c1_i32_72 = arith.constant 1 : i32
    %350 = vector.broadcast %c1_i32_72 : i32 to vector<1x128xi32>
    %351 = arith.cmpi eq, %346, %350 : vector<1x128xi32>
    %352 = vector.shape_cast %351 : vector<1x128xi1> to vector<1x128xi1>
    %353 = vector.broadcast %352 : vector<1x128xi1> to vector<48x128xi1>
    %354 = vector.shape_cast %2 : vector<48x1xf32> to vector<48x1xf32>
    %355 = vector.broadcast %354 : vector<48x1xf32> to vector<48x128xf32>
    %356 = vector.shape_cast %3 : vector<48x1xf32> to vector<48x1xf32>
    %357 = vector.broadcast %356 : vector<48x1xf32> to vector<48x128xf32>
    %358 = arith.select %353, %355, %357 : vector<48x128xi1>, vector<48x128xf32>
    %359 = vector.shape_cast %349 : vector<1x128xi1> to vector<1x128xi1>
    %360 = vector.broadcast %359 : vector<1x128xi1> to vector<48x128xi1>
    %361 = vector.shape_cast %1 : vector<48x1xf32> to vector<48x1xf32>
    %362 = vector.broadcast %361 : vector<48x1xf32> to vector<48x128xf32>
    %363 = arith.select %360, %362, %358 : vector<48x128xi1>, vector<48x128xf32>
    %364 = vector.extract_strided_slice %363 {offsets = [0, 0], sizes = [16, 128], strides = [1, 1]} : vector<48x128xf32> to vector<16x128xf32>
    %365 = vector.extract_strided_slice %347 {offsets = [0, 0], sizes = [16, 128], strides = [1, 1]} : vector<48x128xf32> to vector<16x128xf32>
    %366 = arith.addf %364, %365 : vector<16x128xf32>
    %367 = arith.negf %366 : vector<16x128xf32>
    %368 = math.exp %367 : vector<16x128xf32>
    %cst_73 = arith.constant 1.000000e+00 : f32
    %369 = vector.broadcast %cst_73 : f32 to vector<16x128xf32>
    %370 = arith.addf %369, %368 : vector<16x128xf32>
    %371 = arith.divf %369, %370 : vector<16x128xf32>
    %372 = vector.extract_strided_slice %363 {offsets = [16, 0], sizes = [16, 128], strides = [1, 1]} : vector<48x128xf32> to vector<16x128xf32>
    %373 = vector.extract_strided_slice %347 {offsets = [16, 0], sizes = [16, 128], strides = [1, 1]} : vector<48x128xf32> to vector<16x128xf32>
    %374 = arith.addf %372, %373 : vector<16x128xf32>
    %375 = arith.negf %374 : vector<16x128xf32>
    %376 = math.exp %375 : vector<16x128xf32>
    %cst_74 = arith.constant 1.000000e+00 : f32
    %377 = vector.broadcast %cst_74 : f32 to vector<16x128xf32>
    %378 = arith.addf %377, %376 : vector<16x128xf32>
    %379 = arith.divf %377, %378 : vector<16x128xf32>
    %380 = vector.extract_strided_slice %363 {offsets = [32, 0], sizes = [16, 128], strides = [1, 1]} : vector<48x128xf32> to vector<16x128xf32>
    %381 = vector.extract_strided_slice %347 {offsets = [32, 0], sizes = [16, 128], strides = [1, 1]} : vector<48x128xf32> to vector<16x128xf32>
    %382 = vector.broadcast %4 : vector<16x1xf32> to vector<16x128xf32>
    %383 = arith.addf %381, %382 : vector<16x128xf32>
    %384 = arith.mulf %371, %383 : vector<16x128xf32>
    %385 = arith.addf %380, %384 : vector<16x128xf32>
    %386 = math.tanh %385 : vector<16x128xf32>
    %cst_75 = arith.constant 1.000000e+00 : f32
    %387 = vector.broadcast %cst_75 : f32 to vector<16x128xf32>
    %388 = arith.subf %387, %379 : vector<16x128xf32>
    %389 = arith.mulf %388, %386 : vector<16x128xf32>
    %390 = arith.mulf %379, %343 : vector<16x128xf32>
    %391 = arith.addf %389, %390 : vector<16x128xf32>
    %392 = arith.addf %344, %391 : vector<16x128xf32>
    %cst_76 = arith.constant 1.250000e-01 : f32
    %393 = vector.broadcast %cst_76 : f32 to vector<16x128xf32>
    %394 = arith.mulf %392, %393 : vector<16x128xf32>
    %c0_77 = arith.constant 0 : index
    %c0_78 = arith.constant 0 : index
    %395 = vector.load %arg2[%c0_77, %c0_78] : memref<16x128xf32, #tpu.memory_space<vmem>>, vector<16x128xf32>
    %396 = vector.broadcast %5 : vector<16x1xf32> to vector<16x128xf32>
    %397 = arith.mulf %395, %396 : vector<16x128xf32>
    %398 = vector.broadcast %6 : vector<16x1xf32> to vector<16x128xf32>
    %399 = arith.mulf %394, %398 : vector<16x128xf32>
    %400 = arith.addf %397, %399 : vector<16x128xf32>
    %cst_79 = arith.constant dense<0.000000e+00> : vector<128xf32>
    %401 = vector.multi_reduction <add>, %400, %cst_79 [0] : vector<16x128xf32> to vector<128xf32>
    %402 = vector.shape_cast %401 : vector<128xf32> to vector<1x128xf32>
    %c0_80 = arith.constant 0 : index
    %c0_81 = arith.constant 0 : index
    %403 = memref.load %arg5[%c0_80, %c0_81] : memref<1x1xf32, #tpu.memory_space<smem>>
    %404 = vector.broadcast %403 : f32 to vector<1x128xf32>
    %405 = arith.addf %402, %404 : vector<1x128xf32>
    %c0_82 = arith.constant 0 : index
    %c0_83 = arith.constant 0 : index
    %406 = vector.load %arg6[%c0_82, %c0_83] : memref<1x128xf32, #tpu.memory_space<vmem>>, vector<1x128xf32>
    tpu.vector_store %arg6[%c0_82, %c0_83], %405 {strides = array<i32>} : memref<1x128xf32, #tpu.memory_space<vmem>>, vector<1x128xf32>,
    return
  }
  func.func @transform_0(%arg0: i32) -> (i32, i32, i32) {
    %c0_i32 = arith.constant 0 : i32
    %c0_i32_0 = arith.constant 0 : i32
    %c0_i32_1 = arith.constant 0 : i32
    return %c0_i32, %c0_i32_0, %arg0 : i32, i32, i32
  }
  func.func @transform_1(%arg0: i32) -> (i32, i32) {
    %c0_i32 = arith.constant 0 : i32
    %c0_i32_0 = arith.constant 0 : i32
    return %c0_i32, %arg0 : i32, i32
  }
  func.func @transform_2(%arg0: i32) -> (i32, i32) {
    %c0_i32 = arith.constant 0 : i32
    %c0_i32_0 = arith.constant 0 : i32
    %c0_i32_1 = arith.constant 0 : i32
    return %c0_i32, %c0_i32_0 : i32, i32
  }
  func.func @transform_3(%arg0: i32) -> (i32, i32) {
    %c0_i32 = arith.constant 0 : i32
    %c0_i32_0 = arith.constant 0 : i32
    %c0_i32_1 = arith.constant 0 : i32
    return %c0_i32, %c0_i32_0 : i32, i32
  }
  func.func @transform_4(%arg0: i32) -> (i32, i32) {
    %c0_i32 = arith.constant 0 : i32
    %c0_i32_0 = arith.constant 0 : i32
    %c0_i32_1 = arith.constant 0 : i32
    return %c0_i32, %c0_i32_0 : i32, i32
  }
  func.func @transform_5(%arg0: i32) -> (i32, i32) {
    %c0_i32 = arith.constant 0 : i32
    %c0_i32_0 = arith.constant 0 : i32
    return %c0_i32, %arg0 : i32, i32
  }
}

</mosaic_0001>

<llo_original>
// kernel: aqy_forward.1
$region0: #{aqy_forward.1}
  #allocation0 [shape = 'u32[]', space=smem, size = 0x4, offset = 0x4, fixed_abs, tag = 'smem constant byte address 0x4 - core index']
  #allocation1 [shape = 'u32[144,128]{1,0:T(1,128)}', space=vmem, size = 0x12000, scoped, tag = 'internal scratch']
  #allocation2 [shape = 'f32[1,1]{1,0:T(1,128)S(6)}', space=smem, size = 0x200, scoped, tag = 'scoped memory for aqy_forward.1']
  %s0 = inlined_call_operand.vmem [shape: s32[8,1,128], index: 0, kind: input, shape index: {}]
  %s1 = inlined_call_operand.vmem [shape: f32[16,128], index: 1, kind: input, shape index: {}]
  %s2 = inlined_call_operand.vmem [shape: f32[48,16], index: 2, kind: input, shape index: {}]
  %s3 = inlined_call_operand.vmem [shape: f32[64,3], index: 3, kind: input, shape index: {}]
  %s4 = inlined_call_operand.<no memory space> [shape: f32[1,1], index: 4, kind: input, shape index: {}]
  %s5 = inlined_call_operand.vmem [shape: f32[1,128], index: 5, kind: output, shape index: {}]
  %s6 = sld [smem:[#allocation0]]
  $region30: #{aqy_forward.1} parent=0
    _
  %s8 = ssub.s32 1, %s6
  %s9 = scalar_select 0, %s8, %s6
  %10 = sst [smem:[#allocation2]] %s4
  // Predicated region
  $region2: #{aqy_forward.1} parent=0 // pred_check
    _
  $region3: #{aqy_forward.1} parent=0 // pred_check_branch
    %12 = sbr.rel (0) target = $region5
  $region4: #{aqy_forward.1} parent=0 // pred_region
    _
  $region5: #{aqy_forward.1} parent=0 // pred_fallthru
    _
  // Predicated region
  $region6: #{aqy_forward.1} parent=0 // pred_check
    _
  $region7: #{aqy_forward.1} parent=0 // pred_check_branch
    %14 = sbr.rel (0) target = $region9
  $region8: #{aqy_forward.1} parent=0 // pred_region
    _
  $region9: #{aqy_forward.1} parent=0 // pred_fallthru
    _
  // Predicated region
  $region10: #{aqy_forward.1} parent=0 // pred_check
    _
  $region11: #{aqy_forward.1} parent=0 // pred_check_branch
    %16 = sbr.rel (0) target = $region13
  $region12: #{aqy_forward.1} parent=0 // pred_region
    _
  $region13: #{aqy_forward.1} parent=0 // pred_fallthru
    _
  // Predicated region
  $region14: #{aqy_forward.1} parent=0 // pred_check
    _
  $region15: #{aqy_forward.1} parent=0 // pred_check_branch
    %18 = sbr.rel (0) target = $region17
  $region16: #{aqy_forward.1} parent=0 // pred_region
    _
  $region17: #{aqy_forward.1} parent=0 // pred_fallthru
    _
  // Predicated region
  $region18: #{aqy_forward.1} parent=0 // pred_check
    _
  $region19: #{aqy_forward.1} parent=0 // pred_check_branch
    %20 = sbr.rel (0) target = $region21
  $region20: #{aqy_forward.1} parent=0 // pred_region
    _
  $region21: #{aqy_forward.1} parent=0 // pred_fallthru
    _
  %v21 = vld [vmem:[%s2] sm:$0xff]
  %v22 = vld [vmem:[%s2 + $0x8] sm:$0xff]
  %v23 = vld [vmem:[%s2 + $0x10] sm:$0xff]
  %v24 = vld [vmem:[%s2 + $0x18] sm:$0xff]
  %v25 = vld [vmem:[%s2 + $0x20] sm:$0xff]
  %v26 = vld [vmem:[%s2 + $0x28] sm:$0xff]
  %v27 = vld [vmem:[%s3] sm:$0xff]
  %v28 = vld [vmem:[%s3 + $0x8] sm:$0xff]
  %v29 = vld [vmem:[%s3 + $0x10] sm:$0xff]
  %v30 = vld [vmem:[%s3 + $0x18] sm:$0xff]
  %v31 = vld [vmem:[%s3 + $0x20] sm:$0xff]
  %v32 = vld [vmem:[%s3 + $0x28] sm:$0xff]
  %v33 = vld [vmem:[%s3 + $0x30] sm:$0xff]
  %v34 = vld [vmem:[%s3 + $0x38] sm:$0xff]
  %v35 = vld [vmem:[%s0] sm:$0x1]
  %vm36 = vcmask 130048
  %v38 = vsel %vm36, %v21, 0
  %v41 = vsel %vm36, %v22, 0
  %v44 = vsel %vm36, %v23, 0
  %v47 = vsel %vm36, %v24, 0
  %v50 = vsel %vm36, %v25, 0
  %v53 = vsel %vm36, %v26, 0
  %55 = vmatprep.subr.mxu0 0.0
  %56 = vmatpush1.msra.mxu0 0.0
  %57 = vmatprep.subr.mxu0 0.0
  %58 = vmatpush1.msra.mxu0 0.0
  %59 = vmatprep.subr.mxu0 0.0
  %60 = vmatpush1.msra.mxu0 0.0
  %61 = vmatprep.subr.mxu0 0.0
  %62 = vmatpush1.msra.mxu0 0.0
  %63 = vmatprep.subr.mxu0 0.0
  %64 = vmatpush1.msra.mxu0 0.0
  %65 = vmatprep.subr.mxu0 0.0
  %66 = vmatpush1.msra.mxu0 0.0
  %67 = vmatprep.subr.mxu0 0.0
  %68 = vmatpush1.msra.mxu0 0.0
  %69 = vmatprep.subr.mxu0 0.0
  %70 = vmatpush1.msra.mxu0 0.0
  %71 = vmatprep.subr.mxu0 0.0
  %72 = vmatpush1.msra.mxu0 0.0
  %73 = vmatprep.subr.mxu0 0.0
  %74 = vmatpush1.msra.mxu0 0.0
  %75 = vmatprep.subr.mxu0 0.0
  %76 = vmatpush1.msra.mxu0 0.0
  %77 = vmatprep.subr.mxu0 0.0
  %78 = vmatpush1.msra.mxu0 0.0
  %79 = vmatprep.subr.mxu0 0.0
  %80 = vmatpush1.msra.mxu0 0.0
  %81 = vmatprep.subr.mxu0 0.0
  %82 = vmatpush1.msra.mxu0 0.0
  %83 = vmatprep.subr.mxu0 0.0
  %84 = vmatpush1.msra.mxu0 0.0
  %85 = vmatprep.subr.mxu0 0.0
  %86 = vmatpush1.msra.mxu0 0.0
  %87 = vmatprep.subr.mxu0 0.0
  %88 = vmatpush1.msra.mxu0 0.0
  %89 = vmatprep.subr.mxu0 0.0
  %90 = vmatpush1.msra.mxu0 0.0
  %91 = vmatprep.subr.mxu0 0.0
  %92 = vmatpush1.msra.mxu0 0.0
  %93 = vmatprep.subr.mxu0 0.0
  %94 = vmatpush1.msra.mxu0 0.0
  %95 = vmatprep.subr.mxu0 0.0
  %96 = vmatpush1.msra.mxu0 0.0
  %97 = vmatprep.subr.mxu0 0.0
  %98 = vmatpush1.msra.mxu0 0.0
  %99 = vmatprep.subr.mxu0 0.0
  %100 = vmatpush1.msra.mxu0 0.0
  %101 = vmatprep.subr.mxu0 0.0
  %102 = vmatpush1.msra.mxu0 0.0
  %103 = vmatprep.subr.mxu0 0.0
  %104 = vmatpush1.msra.mxu0 0.0
  %105 = vmatprep.subr.mxu0 0.0
  %106 = vmatpush1.msra.mxu0 0.0
  %107 = vmatprep.subr.mxu0 0.0
  %108 = vmatpush1.msra.mxu0 0.0
  %109 = vmatprep.subr.mxu0 0.0
  %110 = vmatpush1.msra.mxu0 0.0
  %111 = vmatprep.subr.mxu0 0.0
  %112 = vmatpush1.msra.mxu0 0.0
  %113 = vmatprep.subr.mxu0 0.0
  %114 = vmatpush1.msra.mxu0 0.0
  %115 = vmatprep.subr.mxu0 0.0
  %116 = vmatpush1.msra.mxu0 0.0
  %117 = vmatprep.subr.mxu0 0.0
  %118 = vmatpush1.msra.mxu0 0.0
  %119 = vmatprep.mubr.f32.mxu0 0.0
  %120 = vmatmul.mubr.f32.gmra.mrb[0].mxu0 %v38
  %v121 = vpop.f32.mrb[0].mxu0
  %v122 = vadd.f32 0.0, %v121
  %v123 = vpop.f32.mrb[0].mxu0
  %124 = vmatprep.mubr.f32.mxu0 0.0
  %125 = vmatmul.mubr.f32.gmra.mrb[0].mxu0 %v41
  %v126 = vpop.f32.mrb[0].mxu0
  %v127 = vadd.f32 0.0, %v126
  %v128 = vpop.f32.mrb[0].mxu0
  %129 = vmatprep.mubr.f32.mxu0 0.0
  %130 = vmatmul.mubr.f32.gmra.mrb[0].mxu0 %v44
  %v131 = vpop.f32.mrb[0].mxu0
  %v132 = vadd.f32 0.0, %v131
  %v133 = vpop.f32.mrb[0].mxu0
  %134 = vmatprep.mubr.f32.mxu0 0.0
  %135 = vmatmul.mubr.f32.gmra.mrb[0].mxu0 %v47
  %v136 = vpop.f32.mrb[0].mxu0
  %v137 = vadd.f32 0.0, %v136
  %v138 = vpop.f32.mrb[0].mxu0
  %139 = vmatprep.mubr.f32.mxu0 0.0
  %140 = vmatmul.mubr.f32.gmra.mrb[0].mxu0 %v50
  %v141 = vpop.f32.mrb[0].mxu0
  %v142 = vadd.f32 0.0, %v141
  %v143 = vpop.f32.mrb[0].mxu0
  %144 = vmatprep.mubr.f32.mxu0 0.0
  %145 = vmatmul.mubr.f32.gmra.mrb[0].mxu0 %v53
  %v146 = vpop.f32.mrb[0].mxu0
  %v147 = vadd.f32 0.0, %v146
  %v148 = vpop.f32.mrb[0].mxu0
  %149 = vdwg.mxu0
  %vm150 = vcmp.eq.s32.totalorder %v35, 0
  %vm151 = vcmp.eq.s32.totalorder %v35, 1
  %v152 = vsel %vm151, 1, 0
  %v153 = vlaneseq
  %v154 = vshrl.u32 %v153, 7
  %v155 = vsub.s32 0, %v154
  %v156 = vrot.slane %v152, %v155
  %vm157 = vcmp.eq.s32.totalorder %v156, 1
  %159 = vset.pattern.permute.xlu0 1
  %160 = vperm.xlu0 %159, %v27
  %v161 = vpop.permute.xlu0 %160
  %164 = vset.pattern.permute.xlu0 1
  %165 = vperm.xlu0 %164, %v28
  %v166 = vpop.permute.xlu0 %165
  %169 = vset.pattern.permute.xlu0 1
  %170 = vperm.xlu0 %169, %v29
  %v171 = vpop.permute.xlu0 %170
  %174 = vset.pattern.permute.xlu0 1
  %175 = vperm.xlu0 %174, %v30
  %v176 = vpop.permute.xlu0 %175
  %179 = vset.pattern.permute.xlu0 1
  %180 = vperm.xlu0 %179, %v31
  %v181 = vpop.permute.xlu0 %180
  %184 = vset.pattern.permute.xlu0 1
  %185 = vperm.xlu0 %184, %v32
  %v186 = vpop.permute.xlu0 %185
  %188 = vset.pattern.permute.xlu0 2
  %189 = vperm.xlu0 %188, %v27
  %v190 = vpop.permute.xlu0 %189
  %192 = vset.pattern.permute.xlu0 2
  %193 = vperm.xlu0 %192, %v28
  %v194 = vpop.permute.xlu0 %193
  %196 = vset.pattern.permute.xlu0 2
  %197 = vperm.xlu0 %196, %v29
  %v198 = vpop.permute.xlu0 %197
  %200 = vset.pattern.permute.xlu0 2
  %201 = vperm.xlu0 %200, %v30
  %v202 = vpop.permute.xlu0 %201
  %204 = vset.pattern.permute.xlu0 2
  %205 = vperm.xlu0 %204, %v31
  %v206 = vpop.permute.xlu0 %205
  %208 = vset.pattern.permute.xlu0 2
  %209 = vperm.xlu0 %208, %v32
  %v210 = vpop.permute.xlu0 %209
  %v212 = vsel %vm157, %v161, %v190
  %v213 = vsel %vm157, %v166, %v194
  %v214 = vsel %vm157, %v171, %v198
  %v215 = vsel %vm157, %v176, %v202
  %v216 = vsel %vm157, %v181, %v206
  %v217 = vsel %vm157, %v186, %v210
  %v218 = vsel %vm150, 1, 0
  %v219 = vlaneseq
  %v220 = vshrl.u32 %v219, 7
  %v221 = vsub.s32 0, %v220
  %v222 = vrot.slane %v218, %v221
  %vm223 = vcmp.eq.s32.totalorder %v222, 1
  %224 = vset.pattern.permute.xlu0 0
  %225 = vperm.xlu0 %224, %v27
  %v226 = vpop.permute.xlu0 %225
  %228 = vset.pattern.permute.xlu0 0
  %229 = vperm.xlu0 %228, %v28
  %v230 = vpop.permute.xlu0 %229
  %232 = vset.pattern.permute.xlu0 0
  %233 = vperm.xlu0 %232, %v29
  %v234 = vpop.permute.xlu0 %233
  %236 = vset.pattern.permute.xlu0 0
  %237 = vperm.xlu0 %236, %v30
  %v238 = vpop.permute.xlu0 %237
  %240 = vset.pattern.permute.xlu0 0
  %241 = vperm.xlu0 %240, %v31
  %v242 = vpop.permute.xlu0 %241
  %244 = vset.pattern.permute.xlu0 0
  %245 = vperm.xlu0 %244, %v32
  %v246 = vpop.permute.xlu0 %245
  %v248 = vsel %vm223, %v226, %v212
  %v249 = vsel %vm223, %v230, %v213
  %v250 = vsel %vm223, %v234, %v214
  %v251 = vsel %vm223, %v238, %v215
  %v252 = vsel %vm223, %v242, %v216
  %v253 = vsel %vm223, %v246, %v217
  %v254 = vadd.f32 %v248, %v122
  %v255 = vadd.f32 %v249, %v127
  %v256 = vxor.u32 %v254, 2147483648
  %v257 = vxor.u32 %v255, 2147483648
  %v258 = vmul.f32 %v256, 1.442695
  %v259 = vpow.pop %v258
  %v260 = vmul.f32 %v257, 1.442695
  %v261 = vpow.pop %v260
  %v262 = vadd.f32 %v259, 1.0
  %v263 = vadd.f32 %v261, 1.0
  %v264 = vrcp.pop %v262
  %v265 = vmul.f32 1.0, %v264
  %v266 = vrcp.pop %v263
  %v267 = vmul.f32 1.0, %v266
  %v268 = vadd.f32 %v250, %v132
  %v269 = vadd.f32 %v251, %v137
  %v270 = vxor.u32 %v268, 2147483648
  %v271 = vxor.u32 %v269, 2147483648
  %v272 = vmul.f32 %v270, 1.442695
  %v273 = vpow.pop %v272
  %v274 = vmul.f32 %v271, 1.442695
  %v275 = vpow.pop %v274
  %v276 = vadd.f32 %v273, 1.0
  %v277 = vadd.f32 %v275, 1.0
  %v278 = vrcp.pop %v276
  %v279 = vmul.f32 1.0, %v278
  %v280 = vrcp.pop %v277
  %v281 = vmul.f32 1.0, %v280
  %283 = vset.pattern.permute.xlu0 0
  %284 = vperm.xlu0 %283, %v33
  %v285 = vpop.permute.xlu0 %284
  %288 = vset.pattern.permute.xlu0 0
  %289 = vperm.xlu0 %288, %v34
  %v290 = vpop.permute.xlu0 %289
  %v292 = vadd.f32 %v142, %v285
  %v293 = vadd.f32 %v147, %v290
  %v294 = vmul.f32 %v265, %v292
  %v295 = vmul.f32 %v267, %v293
  %v296 = vadd.f32 %v252, %v294
  %v297 = vadd.f32 %v253, %v295
  %v298 = vtanh.pop %v296
  %v299 = vtanh.pop %v297
  %v300 = vsub.f32 1.0, %v279
  %v301 = vsub.f32 1.0, %v281
  %v302 = vmul.f32 %v300, %v298
  %v303 = vmul.f32 %v301, %v299
  %v304 = vmul.f32 %v279, 0.0
  %v305 = vmul.f32 %v281, 0.0
  %v306 = vadd.f32 %v302, %v304
  %v307 = vadd.f32 %v303, %v305
  %v308 = vadd.f32 %v306, 0.0
  %v309 = vadd.f32 %v307, 0.0
  %s310 = scalar_lea.vmem %s0, 1
  %v311 = vld [vmem:[%s310] sm:$0x1]
  %312 = vmatprep.subr.mxu0 0.0
  %313 = vmatpush1.msra.mxu0 %v306
  %314 = vmatprep.subr.mxu0 0.0
  %315 = vmatpush1.msra.mxu0 %v307
  %316 = vmatprep.subr.mxu0 0.0
  %317 = vmatpush1.msra.mxu0 0.0
  %318 = vmatprep.subr.mxu0 0.0
  %319 = vmatpush1.msra.mxu0 0.0
  %320 = vmatprep.subr.mxu0 0.0
  %321 = vmatpush1.msra.mxu0 0.0
  %322 = vmatprep.subr.mxu0 0.0
  %323 = vmatpush1.msra.mxu0 0.0
  %324 = vmatprep.subr.mxu0 0.0
  %325 = vmatpush1.msra.mxu0 0.0
  %326 = vmatprep.subr.mxu0 0.0
  %327 = vmatpush1.msra.mxu0 0.0
  %328 = vmatprep.subr.mxu0 0.0
  %329 = vmatpush1.msra.mxu0 0.0
  %330 = vmatprep.subr.mxu0 0.0
  %331 = vmatpush1.msra.mxu0 0.0
  %332 = vmatprep.subr.mxu0 0.0
  %333 = vmatpush1.msra.mxu0 0.0
  %334 = vmatprep.subr.mxu0 0.0
  %335 = vmatpush1.msra.mxu0 0.0
  %336 = vmatprep.subr.mxu0 0.0
  %337 = vmatpush1.msra.mxu0 0.0
  %338 = vmatprep.subr.mxu0 0.0
  %339 = vmatpush1.msra.mxu0 0.0
  %340 = vmatprep.subr.mxu0 0.0
  %341 = vmatpush1.msra.mxu0 0.0
  %342 = vmatprep.subr.mxu0 0.0
  %343 = vmatpush1.msra.mxu0 0.0
  %344 = vmatprep.subr.mxu0 0.0
  %345 = vmatpush1.msra.mxu0 0.0
  %346 = vmatprep.subr.mxu0 0.0
  %347 = vmatpush1.msra.mxu0 0.0
  %348 = vmatprep.subr.mxu0 0.0
  %349 = vmatpush1.msra.mxu0 0.0
  %350 = vmatprep.subr.mxu0 0.0
  %351 = vmatpush1.msra.mxu0 0.0
  %352 = vmatprep.subr.mxu0 0.0
  %353 = vmatpush1.msra.mxu0 0.0
  %354 = vmatprep.subr.mxu0 0.0
  %355 = vmatpush1.msra.mxu0 0.0
  %356 = vmatprep.subr.mxu0 0.0
  %357 = vmatpush1.msra.mxu0 0.0
  %358 = vmatprep.subr.mxu0 0.0
  %359 = vmatpush1.msra.mxu0 0.0
  %360 = vmatprep.subr.mxu0 0.0
  %361 = vmatpush1.msra.mxu0 0.0
  %362 = vmatprep.subr.mxu0 0.0
  %363 = vmatpush1.msra.mxu0 0.0
  %364 = vmatprep.subr.mxu0 0.0
  %365 = vmatpush1.msra.mxu0 0.0
  %366 = vmatprep.subr.mxu0 0.0
  %367 = vmatpush1.msra.mxu0 0.0
  %368 = vmatprep.subr.mxu0 0.0
  %369 = vmatpush1.msra.mxu0 0.0
  %370 = vmatprep.subr.mxu0 0.0
  %371 = vmatpush1.msra.mxu0 0.0
  %372 = vmatprep.subr.mxu0 0.0
  %373 = vmatpush1.msra.mxu0 0.0
  %374 = vmatprep.subr.mxu0 0.0
  %375 = vmatpush1.msra.mxu0 0.0
  %376 = vmatprep.mubr.f32.mxu0 0.0
  %377 = vmatmul.mubr.f32.gmra.mrb[0].mxu0 %v38
  %v378 = vpop.f32.mrb[0].mxu0
  %v379 = vadd.f32 0.0, %v378
  %v380 = vpop.f32.mrb[0].mxu0
  %381 = vmatprep.mubr.f32.mxu0 0.0
  %382 = vmatmul.mubr.f32.gmra.mrb[0].mxu0 %v41
  %v383 = vpop.f32.mrb[0].mxu0
  %v384 = vadd.f32 0.0, %v383
  %v385 = vpop.f32.mrb[0].mxu0
  %386 = vmatprep.mubr.f32.mxu0 0.0
  %387 = vmatmul.mubr.f32.gmra.mrb[0].mxu0 %v44
  %v388 = vpop.f32.mrb[0].mxu0
  %v389 = vadd.f32 0.0, %v388
  %v390 = vpop.f32.mrb[0].mxu0
  %391 = vmatprep.mubr.f32.mxu0 0.0
  %392 = vmatmul.mubr.f32.gmra.mrb[0].mxu0 %v47
  %v393 = vpop.f32.mrb[0].mxu0
  %v394 = vadd.f32 0.0, %v393
  %v395 = vpop.f32.mrb[0].mxu0
  %396 = vmatprep.mubr.f32.mxu0 0.0
  %397 = vmatmul.mubr.f32.gmra.mrb[0].mxu0 %v50
  %v398 = vpop.f32.mrb[0].mxu0
  %v399 = vadd.f32 0.0, %v398
  %v400 = vpop.f32.mrb[0].mxu0
  %401 = vmatprep.mubr.f32.mxu0 0.0
  %402 = vmatmul.mubr.f32.gmra.mrb[0].mxu0 %v53
  %v403 = vpop.f32.mrb[0].mxu0
  %v404 = vadd.f32 0.0, %v403
  %v405 = vpop.f32.mrb[0].mxu0
  %406 = vdwg.mxu0
  %vm407 = vcmp.eq.s32.totalorder %v311, 0
  %vm408 = vcmp.eq.s32.totalorder %v311, 1
  %v409 = vsel %vm408, 1, 0
  %v410 = vlaneseq
  %v411 = vshrl.u32 %v410, 7
  %v412 = vsub.s32 0, %v411
  %v413 = vrot.slane %v409, %v412
  %vm414 = vcmp.eq.s32.totalorder %v413, 1
  %v415 = vsel %vm414, %v161, %v190
  %v416 = vsel %vm414, %v166, %v194
  %v417 = vsel %vm414, %v171, %v198
  %v418 = vsel %vm414, %v176, %v202
  %v419 = vsel %vm414, %v181, %v206
  %v420 = vsel %vm414, %v186, %v210
  %v421 = vsel %vm407, 1, 0
  %v422 = vlaneseq
  %v423 = vshrl.u32 %v422, 7
  %v424 = vsub.s32 0, %v423
  %v425 = vrot.slane %v421, %v424
  %vm426 = vcmp.eq.s32.totalorder %v425, 1
  %v427 = vsel %vm426, %v226, %v415
  %v428 = vsel %vm426, %v230, %v416
  %v429 = vsel %vm426, %v234, %v417
  %v430 = vsel %vm426, %v238, %v418
  %v431 = vsel %vm426, %v242, %v419
  %v432 = vsel %vm426, %v246, %v420
  %v433 = vadd.f32 %v427, %v379
  %v434 = vadd.f32 %v428, %v384
  %v435 = vxor.u32 %v433, 2147483648
  %v436 = vxor.u32 %v434, 2147483648
  %v437 = vmul.f32 %v435, 1.442695
  %v438 = vpow.pop %v437
  %v439 = vmul.f32 %v436, 1.442695
  %v440 = vpow.pop %v439
  %v441 = vadd.f32 %v438, 1.0
  %v442 = vadd.f32 %v440, 1.0
  %v443 = vrcp.pop %v441
  %v444 = vmul.f32 1.0, %v443
  %v445 = vrcp.pop %v442
  %v446 = vmul.f32 1.0, %v445
  %v447 = vadd.f32 %v429, %v389
  %v448 = vadd.f32 %v430, %v394
  %v449 = vxor.u32 %v447, 2147483648
  %v450 = vxor.u32 %v448, 2147483648
  %v451 = vmul.f32 %v449, 1.442695
  %v452 = vpow.pop %v451
  %v453 = vmul.f32 %v450, 1.442695
  %v454 = vpow.pop %v453
  %v455 = vadd.f32 %v452, 1.0
  %v456 = vadd.f32 %v454, 1.0
  %v457 = vrcp.pop %v455
  %v458 = vmul.f32 1.0, %v457
  %v459 = vrcp.pop %v456
  %v460 = vmul.f32 1.0, %v459
  %v461 = vadd.f32 %v399, %v285
  %v462 = vadd.f32 %v404, %v290
  %v463 = vmul.f32 %v444, %v461
  %v464 = vmul.f32 %v446, %v462
  %v465 = vadd.f32 %v431, %v463
  %v466 = vadd.f32 %v432, %v464
  %v467 = vtanh.pop %v465
  %v468 = vtanh.pop %v466
  %v469 = vsub.f32 1.0, %v458
  %v470 = vsub.f32 1.0, %v460
  %v471 = vmul.f32 %v469, %v467
  %v472 = vmul.f32 %v470, %v468
  %v473 = vmul.f32 %v458, %v306
  %v474 = vmul.f32 %v460, %v307
  %v475 = vadd.f32 %v471, %v473
  %v476 = vadd.f32 %v472, %v474
  %v477 = vadd.f32 %v308, %v475
  %v478 = vadd.f32 %v309, %v476
  %s479 = scalar_lea.vmem %s0, 2
  %v480 = vld [vmem:[%s479] sm:$0x1]
  %481 = vmatprep.subr.mxu0 0.0
  %482 = vmatpush1.msra.mxu0 %v475
  %483 = vmatprep.subr.mxu0 0.0
  %484 = vmatpush1.msra.mxu0 %v476
  %485 = vmatprep.subr.mxu0 0.0
  %486 = vmatpush1.msra.mxu0 0.0
  %487 = vmatprep.subr.mxu0 0.0
  %488 = vmatpush1.msra.mxu0 0.0
  %489 = vmatprep.subr.mxu0 0.0
  %490 = vmatpush1.msra.mxu0 0.0
  %491 = vmatprep.subr.mxu0 0.0
  %492 = vmatpush1.msra.mxu0 0.0
  %493 = vmatprep.subr.mxu0 0.0
  %494 = vmatpush1.msra.mxu0 0.0
  %495 = vmatprep.subr.mxu0 0.0
  %496 = vmatpush1.msra.mxu0 0.0
  %497 = vmatprep.subr.mxu0 0.0
  %498 = vmatpush1.msra.mxu0 0.0
  %499 = vmatprep.subr.mxu0 0.0
  %500 = vmatpush1.msra.mxu0 0.0
  %501 = vmatprep.subr.mxu0 0.0
  %502 = vmatpush1.msra.mxu0 0.0
  %503 = vmatprep.subr.mxu0 0.0
  %504 = vmatpush1.msra.mxu0 0.0
  %505 = vmatprep.subr.mxu0 0.0
  %506 = vmatpush1.msra.mxu0 0.0
  %507 = vmatprep.subr.mxu0 0.0
  %508 = vmatpush1.msra.mxu0 0.0
  %509 = vmatprep.subr.mxu0 0.0
  %510 = vmatpush1.msra.mxu0 0.0
  %511 = vmatprep.subr.mxu0 0.0
  %512 = vmatpush1.msra.mxu0 0.0
  %513 = vmatprep.subr.mxu0 0.0
  %514 = vmatpush1.msra.mxu0 0.0
  %515 = vmatprep.subr.mxu0 0.0
  %516 = vmatpush1.msra.mxu0 0.0
  %517 = vmatprep.subr.mxu0 0.0
  %518 = vmatpush1.msra.mxu0 0.0
  %519 = vmatprep.subr.mxu0 0.0
  %520 = vmatpush1.msra.mxu0 0.0
  %521 = vmatprep.subr.mxu0 0.0
  %522 = vmatpush1.msra.mxu0 0.0
  %523 = vmatprep.subr.mxu0 0.0
  %524 = vmatpush1.msra.mxu0 0.0
  %525 = vmatprep.subr.mxu0 0.0
  %526 = vmatpush1.msra.mxu0 0.0
  %527 = vmatprep.subr.mxu0 0.0
  %528 = vmatpush1.msra.mxu0 0.0
  %529 = vmatprep.subr.mxu0 0.0
  %530 = vmatpush1.msra.mxu0 0.0
  %531 = vmatprep.subr.mxu0 0.0
  %532 = vmatpush1.msra.mxu0 0.0
  %533 = vmatprep.subr.mxu0 0.0
  %534 = vmatpush1.msra.mxu0 0.0
  %535 = vmatprep.subr.mxu0 0.0
  %536 = vmatpush1.msra.mxu0 0.0
  %537 = vmatprep.subr.mxu0 0.0
  %538 = vmatpush1.msra.mxu0 0.0
  %539 = vmatprep.subr.mxu0 0.0
  %540 = vmatpush1.msra.mxu0 0.0
  %541 = vmatprep.subr.mxu0 0.0
  %542 = vmatpush1.msra.mxu0 0.0
  %543 = vmatprep.subr.mxu0 0.0
  %544 = vmatpush1.msra.mxu0 0.0
  %545 = vmatprep.mubr.f32.mxu0 0.0
  %546 = vmatmul.mubr.f32.gmra.mrb[0].mxu0 %v38
  %v547 = vpop.f32.mrb[0].mxu0
  %v548 = vadd.f32 0.0, %v547
  %v549 = vpop.f32.mrb[0].mxu0
  %550 = vmatprep.mubr.f32.mxu0 0.0
  %551 = vmatmul.mubr.f32.gmra.mrb[0].mxu0 %v41
  %v552 = vpop.f32.mrb[0].mxu0
  %v553 = vadd.f32 0.0, %v552
  %v554 = vpop.f32.mrb[0].mxu0
  %555 = vmatprep.mubr.f32.mxu0 0.0
  %556 = vmatmul.mubr.f32.gmra.mrb[0].mxu0 %v44
  %v557 = vpop.f32.mrb[0].mxu0
  %v558 = vadd.f32 0.0, %v557
  %v559 = vpop.f32.mrb[0].mxu0
  %560 = vmatprep.mubr.f32.mxu0 0.0
  %561 = vmatmul.mubr.f32.gmra.mrb[0].mxu0 %v47
  %v562 = vpop.f32.mrb[0].mxu0
  %v563 = vadd.f32 0.0, %v562
  %v564 = vpop.f32.mrb[0].mxu0
  %565 = vmatprep.mubr.f32.mxu0 0.0
  %566 = vmatmul.mubr.f32.gmra.mrb[0].mxu0 %v50
  %v567 = vpop.f32.mrb[0].mxu0
  %v568 = vadd.f32 0.0, %v567
  %v569 = vpop.f32.mrb[0].mxu0
  %570 = vmatprep.mubr.f32.mxu0 0.0
  %571 = vmatmul.mubr.f32.gmra.mrb[0].mxu0 %v53
  %v572 = vpop.f32.mrb[0].mxu0
  %v573 = vadd.f32 0.0, %v572
  %v574 = vpop.f32.mrb[0].mxu0
  %575 = vdwg.mxu0
  %vm576 = vcmp.eq.s32.totalorder %v480, 0
  %vm577 = vcmp.eq.s32.totalorder %v480, 1
  %v578 = vsel %vm577, 1, 0
  %v579 = vlaneseq
  %v580 = vshrl.u32 %v579, 7
  %v581 = vsub.s32 0, %v580
  %v582 = vrot.slane %v578, %v581
  %vm583 = vcmp.eq.s32.totalorder %v582, 1
  %v584 = vsel %vm583, %v161, %v190
  %v585 = vsel %vm583, %v166, %v194
  %v586 = vsel %vm583, %v171, %v198
  %v587 = vsel %vm583, %v176, %v202
  %v588 = vsel %vm583, %v181, %v206
  %v589 = vsel %vm583, %v186, %v210
  %v590 = vsel %vm576, 1, 0
  %v591 = vlaneseq
  %v592 = vshrl.u32 %v591, 7
  %v593 = vsub.s32 0, %v592
  %v594 = vrot.slane %v590, %v593
  %vm595 = vcmp.eq.s32.totalorder %v594, 1
  %v596 = vsel %vm595, %v226, %v584
  %v597 = vsel %vm595, %v230, %v585
  %v598 = vsel %vm595, %v234, %v586
  %v599 = vsel %vm595, %v238, %v587
  %v600 = vsel %vm595, %v242, %v588
  %v601 = vsel %vm595, %v246, %v589
  %v602 = vadd.f32 %v596, %v548
  %v603 = vadd.f32 %v597, %v553
  %v604 = vxor.u32 %v602, 2147483648
  %v605 = vxor.u32 %v603, 2147483648
  %v606 = vmul.f32 %v604, 1.442695
  %v607 = vpow.pop %v606
  %v608 = vmul.f32 %v605, 1.442695
  %v609 = vpow.pop %v608
  %v610 = vadd.f32 %v607, 1.0
  %v611 = vadd.f32 %v609, 1.0
  %v612 = vrcp.pop %v610
  %v613 = vmul.f32 1.0, %v612
  %v614 = vrcp.pop %v611
  %v615 = vmul.f32 1.0, %v614
  %v616 = vadd.f32 %v598, %v558
  %v617 = vadd.f32 %v599, %v563
  %v618 = vxor.u32 %v616, 2147483648
  %v619 = vxor.u32 %v617, 2147483648
  %v620 = vmul.f32 %v618, 1.442695
  %v621 = vpow.pop %v620
  %v622 = vmul.f32 %v619, 1.442695
  %v623 = vpow.pop %v622
  %v624 = vadd.f32 %v621, 1.0
  %v625 = vadd.f32 %v623, 1.0
  %v626 = vrcp.pop %v624
  %v627 = vmul.f32 1.0, %v626
  %v628 = vrcp.pop %v625
  %v629 = vmul.f32 1.0, %v628
  %v630 = vadd.f32 %v568, %v285
  %v631 = vadd.f32 %v573, %v290
  %v632 = vmul.f32 %v613, %v630
  %v633 = vmul.f32 %v615, %v631
  %v634 = vadd.f32 %v600, %v632
  %v635 = vadd.f32 %v601, %v633
  %v636 = vtanh.pop %v634
  %v637 = vtanh.pop %v635
  %v638 = vsub.f32 1.0, %v627
  %v639 = vsub.f32 1.0, %v629
  %v640 = vmul.f32 %v638, %v636
  %v641 = vmul.f32 %v639, %v637
  %v642 = vmul.f32 %v627, %v475
  %v643 = vmul.f32 %v629, %v476
  %v644 = vadd.f32 %v640, %v642
  %v645 = vadd.f32 %v641, %v643
  %v646 = vadd.f32 %v477, %v644
  %v647 = vadd.f32 %v478, %v645
  %s648 = scalar_lea.vmem %s0, 3
  %v649 = vld [vmem:[%s648] sm:$0x1]
  %650 = vmatprep.subr.mxu0 0.0
  %651 = vmatpush1.msra.mxu0 %v644
  %652 = vmatprep.subr.mxu0 0.0
  %653 = vmatpush1.msra.mxu0 %v645
  %654 = vmatprep.subr.mxu0 0.0
  %655 = vmatpush1.msra.mxu0 0.0
  %656 = vmatprep.subr.mxu0 0.0
  %657 = vmatpush1.msra.mxu0 0.0
  %658 = vmatprep.subr.mxu0 0.0
  %659 = vmatpush1.msra.mxu0 0.0
  %660 = vmatprep.subr.mxu0 0.0
  %661 = vmatpush1.msra.mxu0 0.0
  %662 = vmatprep.subr.mxu0 0.0
  %663 = vmatpush1.msra.mxu0 0.0
  %664 = vmatprep.subr.mxu0 0.0
  %665 = vmatpush1.msra.mxu0 0.0
  %666 = vmatprep.subr.mxu0 0.0
  %667 = vmatpush1.msra.mxu0 0.0
  %668 = vmatprep.subr.mxu0 0.0
  %669 = vmatpush1.msra.mxu0 0.0
  %670 = vmatprep.subr.mxu0 0.0
  %671 = vmatpush1.msra.mxu0 0.0
  %672 = vmatprep.subr.mxu0 0.0
  %673 = vmatpush1.msra.mxu0 0.0
  %674 = vmatprep.subr.mxu0 0.0
  %675 = vmatpush1.msra.mxu0 0.0
  %676 = vmatprep.subr.mxu0 0.0
  %677 = vmatpush1.msra.mxu0 0.0
  %678 = vmatprep.subr.mxu0 0.0
  %679 = vmatpush1.msra.mxu0 0.0
  %680 = vmatprep.subr.mxu0 0.0
  %681 = vmatpush1.msra.mxu0 0.0
  %682 = vmatprep.subr.mxu0 0.0
  %683 = vmatpush1.msra.mxu0 0.0
  %684 = vmatprep.subr.mxu0 0.0
  %685 = vmatpush1.msra.mxu0 0.0
  %686 = vmatprep.subr.mxu0 0.0
  %687 = vmatpush1.msra.mxu0 0.0
  %688 = vmatprep.subr.mxu0 0.0
  %689 = vmatpush1.msra.mxu0 0.0
  %690 = vmatprep.subr.mxu0 0.0
  %691 = vmatpush1.msra.mxu0 0.0
  %692 = vmatprep.subr.mxu0 0.0
  %693 = vmatpush1.msra.mxu0 0.0
  %694 = vmatprep.subr.mxu0 0.0
  %695 = vmatpush1.msra.mxu0 0.0
  %696 = vmatprep.subr.mxu0 0.0
  %697 = vmatpush1.msra.mxu0 0.0
  %698 = vmatprep.subr.mxu0 0.0
  %699 = vmatpush1.msra.mxu0 0.0
  %700 = vmatprep.subr.mxu0 0.0
  %701 = vmatpush1.msra.mxu0 0.0
  %702 = vmatprep.subr.mxu0 0.0
  %703 = vmatpush1.msra.mxu0 0.0
  %704 = vmatprep.subr.mxu0 0.0
  %705 = vmatpush1.msra.mxu0 0.0
  %706 = vmatprep.subr.mxu0 0.0
  %707 = vmatpush1.msra.mxu0 0.0
  %708 = vmatprep.subr.mxu0 0.0
  %709 = vmatpush1.msra.mxu0 0.0
  %710 = vmatprep.subr.mxu0 0.0
  %711 = vmatpush1.msra.mxu0 0.0
  %712 = vmatprep.subr.mxu0 0.0
  %713 = vmatpush1.msra.mxu0 0.0
  %714 = vmatprep.mubr.f32.mxu0 0.0
  %715 = vmatmul.mubr.f32.gmra.mrb[0].mxu0 %v38
  %v716 = vpop.f32.mrb[0].mxu0
  %v717 = vadd.f32 0.0, %v716
  %v718 = vpop.f32.mrb[0].mxu0
  %719 = vmatprep.mubr.f32.mxu0 0.0
  %720 = vmatmul.mubr.f32.gmra.mrb[0].mxu0 %v41
  %v721 = vpop.f32.mrb[0].mxu0
  %v722 = vadd.f32 0.0, %v721
  %v723 = vpop.f32.mrb[0].mxu0
  %724 = vmatprep.mubr.f32.mxu0 0.0
  %725 = vmatmul.mubr.f32.gmra.mrb[0].mxu0 %v44
  %v726 = vpop.f32.mrb[0].mxu0
  %v727 = vadd.f32 0.0, %v726
  %v728 = vpop.f32.mrb[0].mxu0
  %729 = vmatprep.mubr.f32.mxu0 0.0
  %730 = vmatmul.mubr.f32.gmra.mrb[0].mxu0 %v47
  %v731 = vpop.f32.mrb[0].mxu0
  %v732 = vadd.f32 0.0, %v731
  %v733 = vpop.f32.mrb[0].mxu0
  %734 = vmatprep.mubr.f32.mxu0 0.0
  %735 = vmatmul.mubr.f32.gmra.mrb[0].mxu0 %v50
  %v736 = vpop.f32.mrb[0].mxu0
  %v737 = vadd.f32 0.0, %v736
  %v738 = vpop.f32.mrb[0].mxu0
  %739 = vmatprep.mubr.f32.mxu0 0.0
  %740 = vmatmul.mubr.f32.gmra.mrb[0].mxu0 %v53
  %v741 = vpop.f32.mrb[0].mxu0
  %v742 = vadd.f32 0.0, %v741
  %v743 = vpop.f32.mrb[0].mxu0
  %744 = vdwg.mxu0
  %vm745 = vcmp.eq.s32.totalorder %v649, 0
  %vm746 = vcmp.eq.s32.totalorder %v649, 1
  %v747 = vsel %vm746, 1, 0
  %v748 = vlaneseq
  %v749 = vshrl.u32 %v748, 7
  %v750 = vsub.s32 0, %v749
  %v751 = vrot.slane %v747, %v750
  %vm752 = vcmp.eq.s32.totalorder %v751, 1
  %v753 = vsel %vm752, %v161, %v190
  %v754 = vsel %vm752, %v166, %v194
  %v755 = vsel %vm752, %v171, %v198
  %v756 = vsel %vm752, %v176, %v202
  %v757 = vsel %vm752, %v181, %v206
  %v758 = vsel %vm752, %v186, %v210
  %v759 = vsel %vm745, 1, 0
  %v760 = vlaneseq
  %v761 = vshrl.u32 %v760, 7
  %v762 = vsub.s32 0, %v761
  %v763 = vrot.slane %v759, %v762
  %vm764 = vcmp.eq.s32.totalorder %v763, 1
  %v765 = vsel %vm764, %v226, %v753
  %v766 = vsel %vm764, %v230, %v754
  %v767 = vsel %vm764, %v234, %v755
  %v768 = vsel %vm764, %v238, %v756
  %v769 = vsel %vm764, %v242, %v757
  %v770 = vsel %vm764, %v246, %v758
  %v771 = vadd.f32 %v765, %v717
  %v772 = vadd.f32 %v766, %v722
  %v773 = vxor.u32 %v771, 2147483648
  %v774 = vxor.u32 %v772, 2147483648
  %v775 = vmul.f32 %v773, 1.442695
  %v776 = vpow.pop %v775
  %v777 = vmul.f32 %v774, 1.442695
  %v778 = vpow.pop %v777
  %v779 = vadd.f32 %v776, 1.0
  %v780 = vadd.f32 %v778, 1.0
  %v781 = vrcp.pop %v779
  %v782 = vmul.f32 1.0, %v781
  %v783 = vrcp.pop %v780
  %v784 = vmul.f32 1.0, %v783
  %v785 = vadd.f32 %v767, %v727
  %v786 = vadd.f32 %v768, %v732
  %v787 = vxor.u32 %v785, 2147483648
  %v788 = vxor.u32 %v786, 2147483648
  %v789 = vmul.f32 %v787, 1.442695
  %v790 = vpow.pop %v789
  %v791 = vmul.f32 %v788, 1.442695
  %v792 = vpow.pop %v791
  %v793 = vadd.f32 %v790, 1.0
  %v794 = vadd.f32 %v792, 1.0
  %v795 = vrcp.pop %v793
  %v796 = vmul.f32 1.0, %v795
  %v797 = vrcp.pop %v794
  %v798 = vmul.f32 1.0, %v797
  %v799 = vadd.f32 %v737, %v285
  %v800 = vadd.f32 %v742, %v290
  %v801 = vmul.f32 %v782, %v799
  %v802 = vmul.f32 %v784, %v800
  %v803 = vadd.f32 %v769, %v801
  %v804 = vadd.f32 %v770, %v802
  %v805 = vtanh.pop %v803
  %v806 = vtanh.pop %v804
  %v807 = vsub.f32 1.0, %v796
  %v808 = vsub.f32 1.0, %v798
  %v809 = vmul.f32 %v807, %v805
  %v810 = vmul.f32 %v808, %v806
  %v811 = vmul.f32 %v796, %v644
  %v812 = vmul.f32 %v798, %v645
  %v813 = vadd.f32 %v809, %v811
  %v814 = vadd.f32 %v810, %v812
  %v815 = vadd.f32 %v646, %v813
  %v816 = vadd.f32 %v647, %v814
  %s817 = scalar_lea.vmem %s0, 4
  %v818 = vld [vmem:[%s817] sm:$0x1]
  %819 = vmatprep.subr.mxu0 0.0
  %820 = vmatpush1.msra.mxu0 %v813
  %821 = vmatprep.subr.mxu0 0.0
  %822 = vmatpush1.msra.mxu0 %v814
  %823 = vmatprep.subr.mxu0 0.0
  %824 = vmatpush1.msra.mxu0 0.0
  %825 = vmatprep.subr.mxu0 0.0
  %826 = vmatpush1.msra.mxu0 0.0
  %827 = vmatprep.subr.mxu0 0.0
  %828 = vmatpush1.msra.mxu0 0.0
  %829 = vmatprep.subr.mxu0 0.0
  %830 = vmatpush1.msra.mxu0 0.0
  %831 = vmatprep.subr.mxu0 0.0
  %832 = vmatpush1.msra.mxu0 0.0
  %833 = vmatprep.subr.mxu0 0.0
  %834 = vmatpush1.msra.mxu0 0.0
  %835 = vmatprep.subr.mxu0 0.0
  %836 = vmatpush1.msra.mxu0 0.0
  %837 = vmatprep.subr.mxu0 0.0
  %838 = vmatpush1.msra.mxu0 0.0
  %839 = vmatprep.subr.mxu0 0.0
  %840 = vmatpush1.msra.mxu0 0.0
  %841 = vmatprep.subr.mxu0 0.0
  %842 = vmatpush1.msra.mxu0 0.0
  %843 = vmatprep.subr.mxu0 0.0
  %844 = vmatpush1.msra.mxu0 0.0
  %845 = vmatprep.subr.mxu0 0.0
  %846 = vmatpush1.msra.mxu0 0.0
  %847 = vmatprep.subr.mxu0 0.0
  %848 = vmatpush1.msra.mxu0 0.0
  %849 = vmatprep.subr.mxu0 0.0
  %850 = vmatpush1.msra.mxu0 0.0
  %851 = vmatprep.subr.mxu0 0.0
  %852 = vmatpush1.msra.mxu0 0.0
  %853 = vmatprep.subr.mxu0 0.0
  %854 = vmatpush1.msra.mxu0 0.0
  %855 = vmatprep.subr.mxu0 0.0
  %856 = vmatpush1.msra.mxu0 0.0
  %857 = vmatprep.subr.mxu0 0.0
  %858 = vmatpush1.msra.mxu0 0.0
  %859 = vmatprep.subr.mxu0 0.0
  %860 = vmatpush1.msra.mxu0 0.0
  %861 = vmatprep.subr.mxu0 0.0
  %862 = vmatpush1.msra.mxu0 0.0
  %863 = vmatprep.subr.mxu0 0.0
  %864 = vmatpush1.msra.mxu0 0.0
  %865 = vmatprep.subr.mxu0 0.0
  %866 = vmatpush1.msra.mxu0 0.0
  %867 = vmatprep.subr.mxu0 0.0
  %868 = vmatpush1.msra.mxu0 0.0
  %869 = vmatprep.subr.mxu0 0.0
  %870 = vmatpush1.msra.mxu0 0.0
  %871 = vmatprep.subr.mxu0 0.0
  %872 = vmatpush1.msra.mxu0 0.0
  %873 = vmatprep.subr.mxu0 0.0
  %874 = vmatpush1.msra.mxu0 0.0
  %875 = vmatprep.subr.mxu0 0.0
  %876 = vmatpush1.msra.mxu0 0.0
  %877 = vmatprep.subr.mxu0 0.0
  %878 = vmatpush1.msra.mxu0 0.0
  %879 = vmatprep.subr.mxu0 0.0
  %880 = vmatpush1.msra.mxu0 0.0
  %881 = vmatprep.subr.mxu0 0.0
  %882 = vmatpush1.msra.mxu0 0.0
  %883 = vmatprep.mubr.f32.mxu0 0.0
  %884 = vmatmul.mubr.f32.gmra.mrb[0].mxu0 %v38
  %v885 = vpop.f32.mrb[0].mxu0
  %v886 = vadd.f32 0.0, %v885
  %v887 = vpop.f32.mrb[0].mxu0
  %888 = vmatprep.mubr.f32.mxu0 0.0
  %889 = vmatmul.mubr.f32.gmra.mrb[0].mxu0 %v41
  %v890 = vpop.f32.mrb[0].mxu0
  %v891 = vadd.f32 0.0, %v890
  %v892 = vpop.f32.mrb[0].mxu0
  %893 = vmatprep.mubr.f32.mxu0 0.0
  %894 = vmatmul.mubr.f32.gmra.mrb[0].mxu0 %v44
  %v895 = vpop.f32.mrb[0].mxu0
  %v896 = vadd.f32 0.0, %v895
  %v897 = vpop.f32.mrb[0].mxu0
  %898 = vmatprep.mubr.f32.mxu0 0.0
  %899 = vmatmul.mubr.f32.gmra.mrb[0].mxu0 %v47
  %v900 = vpop.f32.mrb[0].mxu0
  %v901 = vadd.f32 0.0, %v900
  %v902 = vpop.f32.mrb[0].mxu0
  %903 = vmatprep.mubr.f32.mxu0 0.0
  %904 = vmatmul.mubr.f32.gmra.mrb[0].mxu0 %v50
  %v905 = vpop.f32.mrb[0].mxu0
  %v906 = vadd.f32 0.0, %v905
  %v907 = vpop.f32.mrb[0].mxu0
  %908 = vmatprep.mubr.f32.mxu0 0.0
  %909 = vmatmul.mubr.f32.gmra.mrb[0].mxu0 %v53
  %v910 = vpop.f32.mrb[0].mxu0
  %v911 = vadd.f32 0.0, %v910
  %v912 = vpop.f32.mrb[0].mxu0
  %913 = vdwg.mxu0
  %vm914 = vcmp.eq.s32.totalorder %v818, 0
  %vm915 = vcmp.eq.s32.totalorder %v818, 1
  %v916 = vsel %vm915, 1, 0
  %v917 = vlaneseq
  %v918 = vshrl.u32 %v917, 7
  %v919 = vsub.s32 0, %v918
  %v920 = vrot.slane %v916, %v919
  %vm921 = vcmp.eq.s32.totalorder %v920, 1
  %v922 = vsel %vm921, %v161, %v190
  %v923 = vsel %vm921, %v166, %v194
  %v924 = vsel %vm921, %v171, %v198
  %v925 = vsel %vm921, %v176, %v202
  %v926 = vsel %vm921, %v181, %v206
  %v927 = vsel %vm921, %v186, %v210
  %v928 = vsel %vm914, 1, 0
  %v929 = vlaneseq
  %v930 = vshrl.u32 %v929, 7
  %v931 = vsub.s32 0, %v930
  %v932 = vrot.slane %v928, %v931
  %vm933 = vcmp.eq.s32.totalorder %v932, 1
  %v934 = vsel %vm933, %v226, %v922
  %v935 = vsel %vm933, %v230, %v923
  %v936 = vsel %vm933, %v234, %v924
  %v937 = vsel %vm933, %v238, %v925
  %v938 = vsel %vm933, %v242, %v926
  %v939 = vsel %vm933, %v246, %v927
  %v940 = vadd.f32 %v934, %v886
  %v941 = vadd.f32 %v935, %v891
  %v942 = vxor.u32 %v940, 2147483648
  %v943 = vxor.u32 %v941, 2147483648
  %v944 = vmul.f32 %v942, 1.442695
  %v945 = vpow.pop %v944
  %v946 = vmul.f32 %v943, 1.442695
  %v947 = vpow.pop %v946
  %v948 = vadd.f32 %v945, 1.0
  %v949 = vadd.f32 %v947, 1.0
  %v950 = vrcp.pop %v948
  %v951 = vmul.f32 1.0, %v950
  %v952 = vrcp.pop %v949
  %v953 = vmul.f32 1.0, %v952
  %v954 = vadd.f32 %v936, %v896
  %v955 = vadd.f32 %v937, %v901
  %v956 = vxor.u32 %v954, 2147483648
  %v957 = vxor.u32 %v955, 2147483648
  %v958 = vmul.f32 %v956, 1.442695
  %v959 = vpow.pop %v958
  %v960 = vmul.f32 %v957, 1.442695
  %v961 = vpow.pop %v960
  %v962 = vadd.f32 %v959, 1.0
  %v963 = vadd.f32 %v961, 1.0
  %v964 = vrcp.pop %v962
  %v965 = vmul.f32 1.0, %v964
  %v966 = vrcp.pop %v963
  %v967 = vmul.f32 1.0, %v966
  %v968 = vadd.f32 %v906, %v285
  %v969 = vadd.f32 %v911, %v290
  %v970 = vmul.f32 %v951, %v968
  %v971 = vmul.f32 %v953, %v969
  %v972 = vadd.f32 %v938, %v970
  %v973 = vadd.f32 %v939, %v971
  %v974 = vtanh.pop %v972
  %v975 = vtanh.pop %v973
  %v976 = vsub.f32 1.0, %v965
  %v977 = vsub.f32 1.0, %v967
  %v978 = vmul.f32 %v976, %v974
  %v979 = vmul.f32 %v977, %v975
  %v980 = vmul.f32 %v965, %v813
  %v981 = vmul.f32 %v967, %v814
  %v982 = vadd.f32 %v978, %v980
  %v983 = vadd.f32 %v979, %v981
  %v984 = vadd.f32 %v815, %v982
  %v985 = vadd.f32 %v816, %v983
  %s986 = scalar_lea.vmem %s0, 5
  %v987 = vld [vmem:[%s986] sm:$0x1]
  %988 = vmatprep.subr.mxu0 0.0
  %989 = vmatpush1.msra.mxu0 %v982
  %990 = vmatprep.subr.mxu0 0.0
  %991 = vmatpush1.msra.mxu0 %v983
  %992 = vmatprep.subr.mxu0 0.0
  %993 = vmatpush1.msra.mxu0 0.0
  %994 = vmatprep.subr.mxu0 0.0
  %995 = vmatpush1.msra.mxu0 0.0
  %996 = vmatprep.subr.mxu0 0.0
  %997 = vmatpush1.msra.mxu0 0.0
  %998 = vmatprep.subr.mxu0 0.0
  %999 = vmatpush1.msra.mxu0 0.0
  %1000 = vmatprep.subr.mxu0 0.0
  %1001 = vmatpush1.msra.mxu0 0.0
  %1002 = vmatprep.subr.mxu0 0.0
  %1003 = vmatpush1.msra.mxu0 0.0
  %1004 = vmatprep.subr.mxu0 0.0
  %1005 = vmatpush1.msra.mxu0 0.0
  %1006 = vmatprep.subr.mxu0 0.0
  %1007 = vmatpush1.msra.mxu0 0.0
  %1008 = vmatprep.subr.mxu0 0.0
  %1009 = vmatpush1.msra.mxu0 0.0
  %1010 = vmatprep.subr.mxu0 0.0
  %1011 = vmatpush1.msra.mxu0 0.0
  %1012 = vmatprep.subr.mxu0 0.0
  %1013 = vmatpush1.msra.mxu0 0.0
  %1014 = vmatprep.subr.mxu0 0.0
  %1015 = vmatpush1.msra.mxu0 0.0
  %1016 = vmatprep.subr.mxu0 0.0
  %1017 = vmatpush1.msra.mxu0 0.0
  %1018 = vmatprep.subr.mxu0 0.0
  %1019 = vmatpush1.msra.mxu0 0.0
  %1020 = vmatprep.subr.mxu0 0.0
  %1021 = vmatpush1.msra.mxu0 0.0
  %1022 = vmatprep.subr.mxu0 0.0
  %1023 = vmatpush1.msra.mxu0 0.0
  %1024 = vmatprep.subr.mxu0 0.0
  %1025 = vmatpush1.msra.mxu0 0.0
  %1026 = vmatprep.subr.mxu0 0.0
  %1027 = vmatpush1.msra.mxu0 0.0
  %1028 = vmatprep.subr.mxu0 0.0
  %1029 = vmatpush1.msra.mxu0 0.0
  %1030 = vmatprep.subr.mxu0 0.0
  %1031 = vmatpush1.msra.mxu0 0.0
  %1032 = vmatprep.subr.mxu0 0.0
  %1033 = vmatpush1.msra.mxu0 0.0
  %1034 = vmatprep.subr.mxu0 0.0
  %1035 = vmatpush1.msra.mxu0 0.0
  %1036 = vmatprep.subr.mxu0 0.0
  %1037 = vmatpush1.msra.mxu0 0.0
  %1038 = vmatprep.subr.mxu0 0.0
  %1039 = vmatpush1.msra.mxu0 0.0
  %1040 = vmatprep.subr.mxu0 0.0
  %1041 = vmatpush1.msra.mxu0 0.0
  %1042 = vmatprep.subr.mxu0 0.0
  %1043 = vmatpush1.msra.mxu0 0.0
  %1044 = vmatprep.subr.mxu0 0.0
  %1045 = vmatpush1.msra.mxu0 0.0
  %1046 = vmatprep.subr.mxu0 0.0
  %1047 = vmatpush1.msra.mxu0 0.0
  %1048 = vmatprep.subr.mxu0 0.0
  %1049 = vmatpush1.msra.mxu0 0.0
  %1050 = vmatprep.subr.mxu0 0.0
  %1051 = vmatpush1.msra.mxu0 0.0
  %1052 = vmatprep.mubr.f32.mxu0 0.0
  %1053 = vmatmul.mubr.f32.gmra.mrb[0].mxu0 %v38
  %v1054 = vpop.f32.mrb[0].mxu0
  %v1055 = vadd.f32 0.0, %v1054
  %v1056 = vpop.f32.mrb[0].mxu0
  %1057 = vmatprep.mubr.f32.mxu0 0.0
  %1058 = vmatmul.mubr.f32.gmra.mrb[0].mxu0 %v41
  %v1059 = vpop.f32.mrb[0].mxu0
  %v1060 = vadd.f32 0.0, %v1059
  %v1061 = vpop.f32.mrb[0].mxu0
  %1062 = vmatprep.mubr.f32.mxu0 0.0
  %1063 = vmatmul.mubr.f32.gmra.mrb[0].mxu0 %v44
  %v1064 = vpop.f32.mrb[0].mxu0
  %v1065 = vadd.f32 0.0, %v1064
  %v1066 = vpop.f32.mrb[0].mxu0
  %1067 = vmatprep.mubr.f32.mxu0 0.0
  %1068 = vmatmul.mubr.f32.gmra.mrb[0].mxu0 %v47
  %v1069 = vpop.f32.mrb[0].mxu0
  %v1070 = vadd.f32 0.0, %v1069
  %v1071 = vpop.f32.mrb[0].mxu0
  %1072 = vmatprep.mubr.f32.mxu0 0.0
  %1073 = vmatmul.mubr.f32.gmra.mrb[0].mxu0 %v50
  %v1074 = vpop.f32.mrb[0].mxu0
  %v1075 = vadd.f32 0.0, %v1074
  %v1076 = vpop.f32.mrb[0].mxu0
  %1077 = vmatprep.mubr.f32.mxu0 0.0
  %1078 = vmatmul.mubr.f32.gmra.mrb[0].mxu0 %v53
  %v1079 = vpop.f32.mrb[0].mxu0
  %v1080 = vadd.f32 0.0, %v1079
  %v1081 = vpop.f32.mrb[0].mxu0
  %1082 = vdwg.mxu0
  %vm1083 = vcmp.eq.s32.totalorder %v987, 0
  %vm1084 = vcmp.eq.s32.totalorder %v987, 1
  %v1085 = vsel %vm1084, 1, 0
  %v1086 = vlaneseq
  %v1087 = vshrl.u32 %v1086, 7
  %v1088 = vsub.s32 0, %v1087
  %v1089 = vrot.slane %v1085, %v1088
  %vm1090 = vcmp.eq.s32.totalorder %v1089, 1
  %v1091 = vsel %vm1090, %v161, %v190
  %v1092 = vsel %vm1090, %v166, %v194
  %v1093 = vsel %vm1090, %v171, %v198
  %v1094 = vsel %vm1090, %v176, %v202
  %v1095 = vsel %vm1090, %v181, %v206
  %v1096 = vsel %vm1090, %v186, %v210
  %v1097 = vsel %vm1083, 1, 0
  %v1098 = vlaneseq
  %v1099 = vshrl.u32 %v1098, 7
  %v1100 = vsub.s32 0, %v1099
  %v1101 = vrot.slane %v1097, %v1100
  %vm1102 = vcmp.eq.s32.totalorder %v1101, 1
  %v1103 = vsel %vm1102, %v226, %v1091
  %v1104 = vsel %vm1102, %v230, %v1092
  %v1105 = vsel %vm1102, %v234, %v1093
  %v1106 = vsel %vm1102, %v238, %v1094
  %v1107 = vsel %vm1102, %v242, %v1095
  %v1108 = vsel %vm1102, %v246, %v1096
  %v1109 = vadd.f32 %v1103, %v1055
  %v1110 = vadd.f32 %v1104, %v1060
  %v1111 = vxor.u32 %v1109, 2147483648
  %v1112 = vxor.u32 %v1110, 2147483648
  %v1113 = vmul.f32 %v1111, 1.442695
  %v1114 = vpow.pop %v1113
  %v1115 = vmul.f32 %v1112, 1.442695
  %v1116 = vpow.pop %v1115
  %v1117 = vadd.f32 %v1114, 1.0
  %v1118 = vadd.f32 %v1116, 1.0
  %v1119 = vrcp.pop %v1117
  %v1120 = vmul.f32 1.0, %v1119
  %v1121 = vrcp.pop %v1118
  %v1122 = vmul.f32 1.0, %v1121
  %v1123 = vadd.f32 %v1105, %v1065
  %v1124 = vadd.f32 %v1106, %v1070
  %v1125 = vxor.u32 %v1123, 2147483648
  %v1126 = vxor.u32 %v1124, 2147483648
  %v1127 = vmul.f32 %v1125, 1.442695
  %v1128 = vpow.pop %v1127
  %v1129 = vmul.f32 %v1126, 1.442695
  %v1130 = vpow.pop %v1129
  %v1131 = vadd.f32 %v1128, 1.0
  %v1132 = vadd.f32 %v1130, 1.0
  %v1133 = vrcp.pop %v1131
  %v1134 = vmul.f32 1.0, %v1133
  %v1135 = vrcp.pop %v1132
  %v1136 = vmul.f32 1.0, %v1135
  %v1137 = vadd.f32 %v1075, %v285
  %v1138 = vadd.f32 %v1080, %v290
  %v1139 = vmul.f32 %v1120, %v1137
  %v1140 = vmul.f32 %v1122, %v1138
  %v1141 = vadd.f32 %v1107, %v1139
  %v1142 = vadd.f32 %v1108, %v1140
  %v1143 = vtanh.pop %v1141
  %v1144 = vtanh.pop %v1142
  %v1145 = vsub.f32 1.0, %v1134
  %v1146 = vsub.f32 1.0, %v1136
  %v1147 = vmul.f32 %v1145, %v1143
  %v1148 = vmul.f32 %v1146, %v1144
  %v1149 = vmul.f32 %v1134, %v982
  %v1150 = vmul.f32 %v1136, %v983
  %v1151 = vadd.f32 %v1147, %v1149
  %v1152 = vadd.f32 %v1148, %v1150
  %v1153 = vadd.f32 %v984, %v1151
  %v1154 = vadd.f32 %v985, %v1152
  %s1155 = scalar_lea.vmem %s0, 6
  %v1156 = vld [vmem:[%s1155] sm:$0x1]
  %1157 = vmatprep.subr.mxu0 0.0
  %1158 = vmatpush1.msra.mxu0 %v1151
  %1159 = vmatprep.subr.mxu0 0.0
  %1160 = vmatpush1.msra.mxu0 %v1152
  %1161 = vmatprep.subr.mxu0 0.0
  %1162 = vmatpush1.msra.mxu0 0.0
  %1163 = vmatprep.subr.mxu0 0.0
  %1164 = vmatpush1.msra.mxu0 0.0
  %1165 = vmatprep.subr.mxu0 0.0
  %1166 = vmatpush1.msra.mxu0 0.0
  %1167 = vmatprep.subr.mxu0 0.0
  %1168 = vmatpush1.msra.mxu0 0.0
  %1169 = vmatprep.subr.mxu0 0.0
  %1170 = vmatpush1.msra.mxu0 0.0
  %1171 = vmatprep.subr.mxu0 0.0
  %1172 = vmatpush1.msra.mxu0 0.0
  %1173 = vmatprep.subr.mxu0 0.0
  %1174 = vmatpush1.msra.mxu0 0.0
  %1175 = vmatprep.subr.mxu0 0.0
  %1176 = vmatpush1.msra.mxu0 0.0
  %1177 = vmatprep.subr.mxu0 0.0
  %1178 = vmatpush1.msra.mxu0 0.0
  %1179 = vmatprep.subr.mxu0 0.0
  %1180 = vmatpush1.msra.mxu0 0.0
  %1181 = vmatprep.subr.mxu0 0.0
  %1182 = vmatpush1.msra.mxu0 0.0
  %1183 = vmatprep.subr.mxu0 0.0
  %1184 = vmatpush1.msra.mxu0 0.0
  %1185 = vmatprep.subr.mxu0 0.0
  %1186 = vmatpush1.msra.mxu0 0.0
  %1187 = vmatprep.subr.mxu0 0.0
  %1188 = vmatpush1.msra.mxu0 0.0
  %1189 = vmatprep.subr.mxu0 0.0
  %1190 = vmatpush1.msra.mxu0 0.0
  %1191 = vmatprep.subr.mxu0 0.0
  %1192 = vmatpush1.msra.mxu0 0.0
  %1193 = vmatprep.subr.mxu0 0.0
  %1194 = vmatpush1.msra.mxu0 0.0
  %1195 = vmatprep.subr.mxu0 0.0
  %1196 = vmatpush1.msra.mxu0 0.0
  %1197 = vmatprep.subr.mxu0 0.0
  %1198 = vmatpush1.msra.mxu0 0.0
  %1199 = vmatprep.subr.mxu0 0.0
  %1200 = vmatpush1.msra.mxu0 0.0
  %1201 = vmatprep.subr.mxu0 0.0
  %1202 = vmatpush1.msra.mxu0 0.0
  %1203 = vmatprep.subr.mxu0 0.0
  %1204 = vmatpush1.msra.mxu0 0.0
  %1205 = vmatprep.subr.mxu0 0.0
  %1206 = vmatpush1.msra.mxu0 0.0
  %1207 = vmatprep.subr.mxu0 0.0
  %1208 = vmatpush1.msra.mxu0 0.0
  %1209 = vmatprep.subr.mxu0 0.0
  %1210 = vmatpush1.msra.mxu0 0.0
  %1211 = vmatprep.subr.mxu0 0.0
  %1212 = vmatpush1.msra.mxu0 0.0
  %1213 = vmatprep.subr.mxu0 0.0
  %1214 = vmatpush1.msra.mxu0 0.0
  %1215 = vmatprep.subr.mxu0 0.0
  %1216 = vmatpush1.msra.mxu0 0.0
  %1217 = vmatprep.subr.mxu0 0.0
  %1218 = vmatpush1.msra.mxu0 0.0
  %1219 = vmatprep.subr.mxu0 0.0
  %1220 = vmatpush1.msra.mxu0 0.0
  %1221 = vmatprep.mubr.f32.mxu0 0.0
  %1222 = vmatmul.mubr.f32.gmra.mrb[0].mxu0 %v38
  %v1223 = vpop.f32.mrb[0].mxu0
  %v1224 = vadd.f32 0.0, %v1223
  %v1225 = vpop.f32.mrb[0].mxu0
  %1226 = vmatprep.mubr.f32.mxu0 0.0
  %1227 = vmatmul.mubr.f32.gmra.mrb[0].mxu0 %v41
  %v1228 = vpop.f32.mrb[0].mxu0
  %v1229 = vadd.f32 0.0, %v1228
  %v1230 = vpop.f32.mrb[0].mxu0
  %1231 = vmatprep.mubr.f32.mxu0 0.0
  %1232 = vmatmul.mubr.f32.gmra.mrb[0].mxu0 %v44
  %v1233 = vpop.f32.mrb[0].mxu0
  %v1234 = vadd.f32 0.0, %v1233
  %v1235 = vpop.f32.mrb[0].mxu0
  %1236 = vmatprep.mubr.f32.mxu0 0.0
  %1237 = vmatmul.mubr.f32.gmra.mrb[0].mxu0 %v47
  %v1238 = vpop.f32.mrb[0].mxu0
  %v1239 = vadd.f32 0.0, %v1238
  %v1240 = vpop.f32.mrb[0].mxu0
  %1241 = vmatprep.mubr.f32.mxu0 0.0
  %1242 = vmatmul.mubr.f32.gmra.mrb[0].mxu0 %v50
  %v1243 = vpop.f32.mrb[0].mxu0
  %v1244 = vadd.f32 0.0, %v1243
  %v1245 = vpop.f32.mrb[0].mxu0
  %1246 = vmatprep.mubr.f32.mxu0 0.0
  %1247 = vmatmul.mubr.f32.gmra.mrb[0].mxu0 %v53
  %v1248 = vpop.f32.mrb[0].mxu0
  %v1249 = vadd.f32 0.0, %v1248
  %v1250 = vpop.f32.mrb[0].mxu0
  %1251 = vdwg.mxu0
  %vm1252 = vcmp.eq.s32.totalorder %v1156, 0
  %vm1253 = vcmp.eq.s32.totalorder %v1156, 1
  %v1254 = vsel %vm1253, 1, 0
  %v1255 = vlaneseq
  %v1256 = vshrl.u32 %v1255, 7
  %v1257 = vsub.s32 0, %v1256
  %v1258 = vrot.slane %v1254, %v1257
  %vm1259 = vcmp.eq.s32.totalorder %v1258, 1
  %v1260 = vsel %vm1259, %v161, %v190
  %v1261 = vsel %vm1259, %v166, %v194
  %v1262 = vsel %vm1259, %v171, %v198
  %v1263 = vsel %vm1259, %v176, %v202
  %v1264 = vsel %vm1259, %v181, %v206
  %v1265 = vsel %vm1259, %v186, %v210
  %v1266 = vsel %vm1252, 1, 0
  %v1267 = vlaneseq
  %v1268 = vshrl.u32 %v1267, 7
  %v1269 = vsub.s32 0, %v1268
  %v1270 = vrot.slane %v1266, %v1269
  %vm1271 = vcmp.eq.s32.totalorder %v1270, 1
  %v1272 = vsel %vm1271, %v226, %v1260
  %v1273 = vsel %vm1271, %v230, %v1261
  %v1274 = vsel %vm1271, %v234, %v1262
  %v1275 = vsel %vm1271, %v238, %v1263
  %v1276 = vsel %vm1271, %v242, %v1264
  %v1277 = vsel %vm1271, %v246, %v1265
  %v1278 = vadd.f32 %v1272, %v1224
  %v1279 = vadd.f32 %v1273, %v1229
  %v1280 = vxor.u32 %v1278, 2147483648
  %v1281 = vxor.u32 %v1279, 2147483648
  %v1282 = vmul.f32 %v1280, 1.442695
  %v1283 = vpow.pop %v1282
  %v1284 = vmul.f32 %v1281, 1.442695
  %v1285 = vpow.pop %v1284
  %v1286 = vadd.f32 %v1283, 1.0
  %v1287 = vadd.f32 %v1285, 1.0
  %v1288 = vrcp.pop %v1286
  %v1289 = vmul.f32 1.0, %v1288
  %v1290 = vrcp.pop %v1287
  %v1291 = vmul.f32 1.0, %v1290
  %v1292 = vadd.f32 %v1274, %v1234
  %v1293 = vadd.f32 %v1275, %v1239
  %v1294 = vxor.u32 %v1292, 2147483648
  %v1295 = vxor.u32 %v1293, 2147483648
  %v1296 = vmul.f32 %v1294, 1.442695
  %v1297 = vpow.pop %v1296
  %v1298 = vmul.f32 %v1295, 1.442695
  %v1299 = vpow.pop %v1298
  %v1300 = vadd.f32 %v1297, 1.0
  %v1301 = vadd.f32 %v1299, 1.0
  %v1302 = vrcp.pop %v1300
  %v1303 = vmul.f32 1.0, %v1302
  %v1304 = vrcp.pop %v1301
  %v1305 = vmul.f32 1.0, %v1304
  %v1306 = vadd.f32 %v1244, %v285
  %v1307 = vadd.f32 %v1249, %v290
  %v1308 = vmul.f32 %v1289, %v1306
  %v1309 = vmul.f32 %v1291, %v1307
  %v1310 = vadd.f32 %v1276, %v1308
  %v1311 = vadd.f32 %v1277, %v1309
  %v1312 = vtanh.pop %v1310
  %v1313 = vtanh.pop %v1311
  %v1314 = vsub.f32 1.0, %v1303
  %v1315 = vsub.f32 1.0, %v1305
  %v1316 = vmul.f32 %v1314, %v1312
  %v1317 = vmul.f32 %v1315, %v1313
  %v1318 = vmul.f32 %v1303, %v1151
  %v1319 = vmul.f32 %v1305, %v1152
  %v1320 = vadd.f32 %v1316, %v1318
  %v1321 = vadd.f32 %v1317, %v1319
  %v1322 = vadd.f32 %v1153, %v1320
  %v1323 = vadd.f32 %v1154, %v1321
  %s1324 = scalar_lea.vmem %s0, 7
  %v1325 = vld [vmem:[%s1324] sm:$0x1]
  %1326 = vmatprep.subr.mxu0 0.0
  %1327 = vmatpush1.msra.mxu0 %v1320
  %1328 = vmatprep.subr.mxu0 0.0
  %1329 = vmatpush1.msra.mxu0 %v1321
  %1330 = vmatprep.subr.mxu0 0.0
  %1331 = vmatpush1.msra.mxu0 0.0
  %1332 = vmatprep.subr.mxu0 0.0
  %1333 = vmatpush1.msra.mxu0 0.0
  %1334 = vmatprep.subr.mxu0 0.0
  %1335 = vmatpush1.msra.mxu0 0.0
  %1336 = vmatprep.subr.mxu0 0.0
  %1337 = vmatpush1.msra.mxu0 0.0
  %1338 = vmatprep.subr.mxu0 0.0
  %1339 = vmatpush1.msra.mxu0 0.0
  %1340 = vmatprep.subr.mxu0 0.0
  %1341 = vmatpush1.msra.mxu0 0.0
  %1342 = vmatprep.subr.mxu0 0.0
  %1343 = vmatpush1.msra.mxu0 0.0
  %1344 = vmatprep.subr.mxu0 0.0
  %1345 = vmatpush1.msra.mxu0 0.0
  %1346 = vmatprep.subr.mxu0 0.0
  %1347 = vmatpush1.msra.mxu0 0.0
  %1348 = vmatprep.subr.mxu0 0.0
  %1349 = vmatpush1.msra.mxu0 0.0
  %1350 = vmatprep.subr.mxu0 0.0
  %1351 = vmatpush1.msra.mxu0 0.0
  %1352 = vmatprep.subr.mxu0 0.0
  %1353 = vmatpush1.msra.mxu0 0.0
  %1354 = vmatprep.subr.mxu0 0.0
  %1355 = vmatpush1.msra.mxu0 0.0
  %1356 = vmatprep.subr.mxu0 0.0
  %1357 = vmatpush1.msra.mxu0 0.0
  %1358 = vmatprep.subr.mxu0 0.0
  %1359 = vmatpush1.msra.mxu0 0.0
  %1360 = vmatprep.subr.mxu0 0.0
  %1361 = vmatpush1.msra.mxu0 0.0
  %1362 = vmatprep.subr.mxu0 0.0
  %1363 = vmatpush1.msra.mxu0 0.0
  %1364 = vmatprep.subr.mxu0 0.0
  %1365 = vmatpush1.msra.mxu0 0.0
  %1366 = vmatprep.subr.mxu0 0.0
  %1367 = vmatpush1.msra.mxu0 0.0
  %1368 = vmatprep.subr.mxu0 0.0
  %1369 = vmatpush1.msra.mxu0 0.0
  %1370 = vmatprep.subr.mxu0 0.0
  %1371 = vmatpush1.msra.mxu0 0.0
  %1372 = vmatprep.subr.mxu0 0.0
  %1373 = vmatpush1.msra.mxu0 0.0
  %1374 = vmatprep.subr.mxu0 0.0
  %1375 = vmatpush1.msra.mxu0 0.0
  %1376 = vmatprep.subr.mxu0 0.0
  %1377 = vmatpush1.msra.mxu0 0.0
  %1378 = vmatprep.subr.mxu0 0.0
  %1379 = vmatpush1.msra.mxu0 0.0
  %1380 = vmatprep.subr.mxu0 0.0
  %1381 = vmatpush1.msra.mxu0 0.0
  %1382 = vmatprep.subr.mxu0 0.0
  %1383 = vmatpush1.msra.mxu0 0.0
  %1384 = vmatprep.subr.mxu0 0.0
  %1385 = vmatpush1.msra.mxu0 0.0
  %1386 = vmatprep.subr.mxu0 0.0
  %1387 = vmatpush1.msra.mxu0 0.0
  %1388 = vmatprep.subr.mxu0 0.0
  %1389 = vmatpush1.msra.mxu0 0.0
  %1390 = vmatprep.mubr.f32.mxu0 0.0
  %1391 = vmatmul.mubr.f32.gmra.mrb[0].mxu0 %v38
  %v1392 = vpop.f32.mrb[0].mxu0
  %v1393 = vadd.f32 0.0, %v1392
  %v1394 = vpop.f32.mrb[0].mxu0
  %1395 = vmatprep.mubr.f32.mxu0 0.0
  %1396 = vmatmul.mubr.f32.gmra.mrb[0].mxu0 %v41
  %v1397 = vpop.f32.mrb[0].mxu0
  %v1398 = vadd.f32 0.0, %v1397
  %v1399 = vpop.f32.mrb[0].mxu0
  %1400 = vmatprep.mubr.f32.mxu0 0.0
  %1401 = vmatmul.mubr.f32.gmra.mrb[0].mxu0 %v44
  %v1402 = vpop.f32.mrb[0].mxu0
  %v1403 = vadd.f32 0.0, %v1402
  %v1404 = vpop.f32.mrb[0].mxu0
  %1405 = vmatprep.mubr.f32.mxu0 0.0
  %1406 = vmatmul.mubr.f32.gmra.mrb[0].mxu0 %v47
  %v1407 = vpop.f32.mrb[0].mxu0
  %v1408 = vadd.f32 0.0, %v1407
  %v1409 = vpop.f32.mrb[0].mxu0
  %1410 = vmatprep.mubr.f32.mxu0 0.0
  %1411 = vmatmul.mubr.f32.gmra.mrb[0].mxu0 %v50
  %v1412 = vpop.f32.mrb[0].mxu0
  %v1413 = vadd.f32 0.0, %v1412
  %v1414 = vpop.f32.mrb[0].mxu0
  %1415 = vmatprep.mubr.f32.mxu0 0.0
  %1416 = vmatmul.mubr.f32.gmra.mrb[0].mxu0 %v53
  %v1417 = vpop.f32.mrb[0].mxu0
  %v1418 = vadd.f32 0.0, %v1417
  %v1419 = vpop.f32.mrb[0].mxu0
  %1420 = vdwg.mxu0
  %vm1421 = vcmp.eq.s32.totalorder %v1325, 0
  %vm1422 = vcmp.eq.s32.totalorder %v1325, 1
  %v1423 = vsel %vm1422, 1, 0
  %v1424 = vlaneseq
  %v1425 = vshrl.u32 %v1424, 7
  %v1426 = vsub.s32 0, %v1425
  %v1427 = vrot.slane %v1423, %v1426
  %vm1428 = vcmp.eq.s32.totalorder %v1427, 1
  %v1429 = vsel %vm1428, %v161, %v190
  %v1430 = vsel %vm1428, %v166, %v194
  %v1431 = vsel %vm1428, %v171, %v198
  %v1432 = vsel %vm1428, %v176, %v202
  %v1433 = vsel %vm1428, %v181, %v206
  %v1434 = vsel %vm1428, %v186, %v210
  %v1435 = vsel %vm1421, 1, 0
  %v1436 = vlaneseq
  %v1437 = vshrl.u32 %v1436, 7
  %v1438 = vsub.s32 0, %v1437
  %v1439 = vrot.slane %v1435, %v1438
  %vm1440 = vcmp.eq.s32.totalorder %v1439, 1
  %v1441 = vsel %vm1440, %v226, %v1429
  %v1442 = vsel %vm1440, %v230, %v1430
  %v1443 = vsel %vm1440, %v234, %v1431
  %v1444 = vsel %vm1440, %v238, %v1432
  %v1445 = vsel %vm1440, %v242, %v1433
  %v1446 = vsel %vm1440, %v246, %v1434
  %v1447 = vadd.f32 %v1441, %v1393
  %v1448 = vadd.f32 %v1442, %v1398
  %v1449 = vxor.u32 %v1447, 2147483648
  %v1450 = vxor.u32 %v1448, 2147483648
  %v1451 = vmul.f32 %v1449, 1.442695
  %v1452 = vpow.pop %v1451
  %v1453 = vmul.f32 %v1450, 1.442695
  %v1454 = vpow.pop %v1453
  %v1455 = vadd.f32 %v1452, 1.0
  %v1456 = vadd.f32 %v1454, 1.0
  %v1457 = vrcp.pop %v1455
  %v1458 = vmul.f32 1.0, %v1457
  %v1459 = vrcp.pop %v1456
  %v1460 = vmul.f32 1.0, %v1459
  %v1461 = vadd.f32 %v1443, %v1403
  %v1462 = vadd.f32 %v1444, %v1408
  %v1463 = vxor.u32 %v1461, 2147483648
  %v1464 = vxor.u32 %v1462, 2147483648
  %v1465 = vmul.f32 %v1463, 1.442695
  %v1466 = vpow.pop %v1465
  %v1467 = vmul.f32 %v1464, 1.442695
  %v1468 = vpow.pop %v1467
  %v1469 = vadd.f32 %v1466, 1.0
  %v1470 = vadd.f32 %v1468, 1.0
  %v1471 = vrcp.pop %v1469
  %v1472 = vmul.f32 1.0, %v1471
  %v1473 = vrcp.pop %v1470
  %v1474 = vmul.f32 1.0, %v1473
  %v1475 = vadd.f32 %v1413, %v285
  %v1476 = vadd.f32 %v1418, %v290
  %v1477 = vmul.f32 %v1458, %v1475
  %v1478 = vmul.f32 %v1460, %v1476
  %v1479 = vadd.f32 %v1445, %v1477
  %v1480 = vadd.f32 %v1446, %v1478
  %v1481 = vtanh.pop %v1479
  %v1482 = vtanh.pop %v1480
  %v1483 = vsub.f32 1.0, %v1472
  %v1484 = vsub.f32 1.0, %v1474
  %v1485 = vmul.f32 %v1483, %v1481
  %v1486 = vmul.f32 %v1484, %v1482
  %v1487 = vmul.f32 %v1472, %v1320
  %v1488 = vmul.f32 %v1474, %v1321
  %v1489 = vadd.f32 %v1485, %v1487
  %v1490 = vadd.f32 %v1486, %v1488
  %v1491 = vadd.f32 %v1322, %v1489
  %v1492 = vadd.f32 %v1323, %v1490
  %v1493 = vmul.f32 %v1491, 0.125
  %v1494 = vmul.f32 %v1492, 0.125
  %v1495 = vld [vmem:[%s1] sm:$0xff]
  %v1496 = vld [vmem:[%s1 + $0x8] sm:$0xff]
  %1497 = vset.pattern.permute.xlu0 1
  %1498 = vperm.xlu0 %1497, %v33
  %v1499 = vpop.permute.xlu0 %1498
  %1501 = vset.pattern.permute.xlu0 1
  %1502 = vperm.xlu0 %1501, %v34
  %v1503 = vpop.permute.xlu0 %1502
  %v1505 = vmul.f32 %v1495, %v1499
  %v1506 = vmul.f32 %v1496, %v1503
  %1507 = vset.pattern.permute.xlu0 2
  %1508 = vperm.xlu0 %1507, %v33
  %v1509 = vpop.permute.xlu0 %1508
  %1511 = vset.pattern.permute.xlu0 2
  %1512 = vperm.xlu0 %1511, %v34
  %v1513 = vpop.permute.xlu0 %1512
  %v1515 = vmul.f32 %v1493, %v1509
  %v1516 = vmul.f32 %v1494, %v1513
  %v1517 = vadd.f32 %v1505, %v1515
  %v1518 = vadd.f32 %v1506, %v1516
  %v1519 = vadd.f32 %v1517, %v1518
  %v1520 = vrot.slane %v1519, 4
  %v1521 = vadd.f32 %v1519, %v1520
  %v1522 = vrot.slane %v1521, 2
  %v1523 = vadd.f32 %v1521, %v1522
  %v1524 = vrot.slane %v1523, 1
  %v1525 = vadd.f32 %v1523, %v1524
  %s1526 = sld [smem:[#allocation2]]
  %v1527 = vstv %s1526
  %v1528 = vadd.f32 %v1525, %v1527
  %1529 = vst [vmem:[%s5] sm:$0x1] %v1528
  // Predicated region
  $region22: #{aqy_forward.1} parent=0 // pred_check
    _
  $region23: #{aqy_forward.1} parent=0 // pred_check_branch
    %1531 = sbr.rel (0) target = $region25
  $region24: #{aqy_forward.1} parent=0 // pred_region
    _
  $region25: #{aqy_forward.1} parent=0 // pred_fallthru
    _
  // Predicated region
  $region26: #{aqy_forward.1} parent=0 // pred_check
    _
  $region27: #{aqy_forward.1} parent=0 // pred_check_branch
    %1533 = sbr.rel (0) target = $region29
  $region28: #{aqy_forward.1} parent=0 // pred_region
    _
  $region29: #{aqy_forward.1} parent=0 // pred_fallthru
    _

</llo_original>
